<compile_context>
chip_gen: v7x
topology: tpu7x:2x2x1
jax: 0.10.0
libtpu: 0.0.40
codegen_flags: <defaults>
</compile_context>

<pallas_src>
import functools

import jax
import jax.numpy as jnp
from jax.experimental import pallas as pl
from jax.experimental.pallas import tpu as pltpu

# ---- small, forward-consistent shapes ----
B = 2          # batch
C_IN = 3       # RGB input channels
H = W = 16     # spatial
F_MAPS = 32    # num_feature_maps (ResNet-50 would be 2048; scaled down)
KH = KW = 3    # stem conv kernel
K_TAPS = KH * KW * C_IN   # 27

F_PAD = 128    # feature maps padded to a full lane width
OUT_PAD = 128  # head output padded to a full lane width (cols 0:3 = v, 3:6 = a)

_VMEM = pl.BlockSpec(memory_space=pltpu.MemorySpace.VMEM)


# ---------------------------------------------------------------------------
# Fused kernel: encoder (K=27 bf16 matmul + bias + ReLU + GAP-as-matmul) + heads
#   patches: (2B*H*W, 27) bf16     wc: (27, F_PAD) bf16     bc: (1, F_PAD) f32
#   wh1, wh2: (F_PAD, OUT_PAD) f32 bh: (1, OUT_PAD) f32
#   out:     (B, OUT_PAD) f32   [cols 0:3 = valence, 3:6 = arousal]
# ---------------------------------------------------------------------------
def va_fused_kernel(patches_ref, wc_ref, bc_ref, wh1_ref, wh2_ref, bh_ref,
                    o_ref, *, n_imgs, hw):
    # encoder: single K=27 bf16 matmul on the MXU, f32 accumulation
    act = jnp.dot(patches_ref[...], wc_ref[...],
                  preferred_element_type=jnp.float32)          # (2B*H*W, F_PAD)
    # bias (pre-ReLU, matches ref) + ReLU in f32 on the VPU (v5e-friendly)
    act = jnp.maximum(act + bc_ref[...], 0.0)

    # global average pool as an MXU matmul against an IN-KERNEL block-diagonal
    # 1/(H*W) matrix (no HBM pool operand, no cross-sublane reduce)
    row = jax.lax.broadcasted_iota(jnp.int32, (n_imgs, n_imgs * hw), 0)
    col = jax.lax.broadcasted_iota(jnp.int32, (n_imgs, n_imgs * hw), 1)
    in_block = (col >= row * hw) & (col < (row + 1) * hw)
    pool = jnp.where(in_block, jnp.float32(1.0 / hw), jnp.float32(0.0))
    pooled = jnp.dot(pool, act, preferred_element_type=jnp.float32)  # (2B, F_PAD)

    nb = n_imgs // 2
    f1 = pooled[:nb, :]                                        # features(img1)
    f2 = pooled[nb:, :]                                        # features(img2)

    # concat-free fused heads: feat @ [wv|wa] == f1 @ W_top + f2 @ W_bot
    out = (jnp.dot(f1, wh1_ref[...], preferred_element_type=jnp.float32)
           + jnp.dot(f2, wh2_ref[...], preferred_element_type=jnp.float32)
           + bh_ref[...])                                      # (B, OUT_PAD)
    o_ref[...] = out.astype(o_ref.dtype)


# ---------------------------------------------------------------------------
# One-time parameter preparation (hoisted out of the per-call forward path)
# ---------------------------------------------------------------------------
def prepare_params(params):
    # conv weight reordered to the (c, kh, kw) tap order produced by
    # lax.conv_general_dilated_patches; F zero-padded to 128 lanes; bf16 MXU input
    wc = jnp.transpose(params["conv_w"], (2, 0, 1, 3)).reshape(K_TAPS, F_MAPS)
    wc = jnp.pad(wc, ((0, 0), (0, F_PAD - F_MAPS))).astype(jnp.bfloat16)
    bc = jnp.pad(params["conv_b"],
                 ((0, 0), (0, F_PAD - F_MAPS))).astype(jnp.float32)   # (1, 128)

    # fused, concat-free head weights: cols 0:3 = valence, 3:6 = arousal (f32)
    wh = jnp.concatenate([params["wv"], params["wa"]], axis=1)        # (2F, 6)
    wh1 = jnp.pad(wh[:F_MAPS],
                  ((0, F_PAD - F_MAPS), (0, OUT_PAD - 6))).astype(jnp.float32)
    wh2 = jnp.pad(wh[F_MAPS:],
                  ((0, F_PAD - F_MAPS), (0, OUT_PAD - 6))).astype(jnp.float32)
    bh = jnp.pad(jnp.concatenate([params["bv"], params["ba"]], axis=1),
                 ((0, 0), (0, OUT_PAD - 6))).astype(jnp.float32)      # (1, 128)
    return {"wc": wc, "bc": bc, "wh1": wh1, "wh2": wh2, "bh": bh}


# ---------------------------------------------------------------------------
# Forward wrapper: minimal per-call glue + one pallas_call
# ---------------------------------------------------------------------------
def va_ranking_forward(img1, img2, prep):
    nb = img1.shape[0]
    n_imgs = 2 * nb
    hw = H * W

    # stack both images along batch -> encoder runs once; bf16 MXU input
    x = jnp.concatenate([img1, img2], axis=0).astype(jnp.bfloat16)  # (2B,Cin,H,W)

    # single-op im2col (pad=1, stride=1); output channel order is (c, kh, kw)
    patches = jax.lax.conv_general_dilated_patches(
        x, filter_shape=(KH, KW), window_strides=(1, 1),
        padding=((1, 1), (1, 1)),
        dimension_numbers=("NCHW", "OIHW", "NHWC"),
    ).reshape(n_imgs * hw, K_TAPS)                                   # (2B*H*W, 27)

    kernel = functools.partial(va_fused_kernel, n_imgs=n_imgs, hw=hw)

    m = n_imgs * hw
    flops = (2 * m * K_TAPS * F_PAD             # conv matmul
             + 2 * n_imgs * m * F_PAD           # GAP-as-matmul
             + 2 * 2 * nb * F_PAD * OUT_PAD)    # fused heads
    bytes_accessed = (m * K_TAPS * 2            # patches (bf16)
                      + K_TAPS * F_PAD * 2      # wc (bf16)
                      + F_PAD * 4               # bc
                      + 2 * F_PAD * OUT_PAD * 4 # wh1, wh2
                      + OUT_PAD * 4             # bh
                      + nb * OUT_PAD * 4)       # out

    out = pl.pallas_call(
        kernel,
        out_shape=jax.ShapeDtypeStruct((nb, OUT_PAD), jnp.float32),
        in_specs=[_VMEM] * 6,
        out_specs=_VMEM,
        cost_estimate=pl.CostEstimate(flops=flops, transcendentals=0,
                                      bytes_accessed=bytes_accessed),
    )(patches, prep["wc"], prep["bc"], prep["wh1"], prep["wh2"], prep["bh"])

    return out[:, 0:3], out[:, 3:6]                             # v, a


# ---------------------------------------------------------------------------
# Pure-JAX f32 reference (sanity check only)
# ---------------------------------------------------------------------------
def reference_forward(img1, img2, params):
    def base(x_nchw):
        x = jnp.transpose(x_nchw, (0, 2, 3, 1))
        xp = jnp.pad(x, ((0, 0), (1, 1), (1, 1), (0, 0)))
        acc = jnp.zeros((x.shape[0], H, W, F_MAPS), jnp.float32)
        for dy in range(KH):
            for dx in range(KW):
                acc += jnp.einsum("bhwc,cf->bhwf",
                                  xp[:, dy:dy + H, dx:dx + W, :],
                                  params["conv_w"][dy, dx])
        acc = jnp.maximum(acc + params["conv_b"][0], 0.0)
        return acc.mean(axis=(1, 2))
    f1, f2 = base(img1), base(img2)
    feat = jnp.concatenate([f1, f2], axis=1)
    return feat @ params["wv"] + params["bv"][0], feat @ params["wa"] + params["ba"][0]


if __name__ == "__main__":
    key = jax.random.PRNGKey(0)
    k_img1, k_img2, k_cw, k_cb, k_wv, k_bv, k_wa, k_ba = jax.random.split(key, 8)

    img1 = jax.random.normal(k_img1, (B, C_IN, H, W), jnp.float32)   # NCHW, as PyTorch
    img2 = jax.random.normal(k_img2, (B, C_IN, H, W), jnp.float32)

    params = {
        "conv_w": 0.1 * jax.random.normal(k_cw, (KH, KW, C_IN, F_MAPS), jnp.float32),
        "conv_b": 0.1 * jax.random.normal(k_cb, (1, F_MAPS), jnp.float32),
        "wv": 0.1 * jax.random.normal(k_wv, (2 * F_MAPS, 3), jnp.float32),
        "bv": 0.1 * jax.random.normal(k_bv, (1, 3), jnp.float32),
        "wa": 0.1 * jax.random.normal(k_wa, (2 * F_MAPS, 3), jnp.float32),
        "ba": 0.1 * jax.random.normal(k_ba, (1, 3), jnp.float32),
    }

    # one-time constant prep (NOT in the per-call path)
    prep = prepare_params(params)
    jax.block_until_ready(prep)

    fwd = jax.jit(va_ranking_forward)
    v, a = fwd(img1, img2, prep)
    jax.block_until_ready((v, a))

    v_ref, a_ref = reference_forward(img1, img2, params)
    assert v.shape == (B, 3) and a.shape == (B, 3)
    # tolerance relaxed vs f32 reference because conv MXU inputs are bf16
    assert jnp.allclose(v, v_ref, atol=1e-2, rtol=1e-2), "valence mismatch vs reference"
    assert jnp.allclose(a, a_ref, atol=1e-2, rtol=1e-2), "arousal mismatch vs reference"

    print("KERNEL_OK")
</pallas_src>

<mosaic_0001>
module attributes {stable_mosaic.version = 11 : i64} {
  func.func @va_fused_kernel(%arg0: memref<1024x27xbf16, #tpu.memory_space<vmem>>, %arg1: memref<27x128xbf16, #tpu.memory_space<vmem>>, %arg2: memref<1x128xf32, #tpu.memory_space<vmem>>, %arg3: memref<128x128xf32, #tpu.memory_space<vmem>>, %arg4: memref<128x128xf32, #tpu.memory_space<vmem>>, %arg5: memref<1x128xf32, #tpu.memory_space<vmem>>, %arg6: memref<2x128xf32, #tpu.memory_space<vmem>>) attributes {dimension_semantics = [], scalar_prefetch = 0 : i64, scratch_operands = 0 : i64, tpu.core_type = #tpu.core_type<tc>} {
    %c0 = arith.constant 0 : index
    %c0_0 = arith.constant 0 : index
    %0 = vector.load %arg0[%c0, %c0_0] : memref<1024x27xbf16, #tpu.memory_space<vmem>>, vector<1024x27xbf16>
    %c0_1 = arith.constant 0 : index
    %c0_2 = arith.constant 0 : index
    %1 = vector.load %arg1[%c0_1, %c0_2] : memref<27x128xbf16, #tpu.memory_space<vmem>>, vector<27x128xbf16>
    %cst = arith.constant dense<0.000000e+00> : vector<1024x128xf32>
    %2 = tpu.matmul %0, %1, %cst {dimension_numbers = #tpu.dot_dimension_numbers<[1], [0], [0], [1], [0, 0, 1, 1], [], []>} : vector<1024x27xbf16>, vector<27x128xbf16>, vector<1024x128xf32> -> vector<1024x128xf32>
    %c0_3 = arith.constant 0 : index
    %c0_4 = arith.constant 0 : index
    %3 = vector.load %arg2[%c0_3, %c0_4] : memref<1x128xf32, #tpu.memory_space<vmem>>, vector<1x128xf32>
    %4 = vector.broadcast %3 : vector<1x128xf32> to vector<1024x128xf32>
    %5 = arith.addf %2, %4 : vector<1024x128xf32>
    %cst_5 = arith.constant 0.000000e+00 : f32
    %6 = vector.broadcast %cst_5 : f32 to vector<1024x128xf32>
    %7 = arith.maximumf %5, %6 : vector<1024x128xf32>
    %8 = tpu.iota {dimensions = array<i32: 0>} : vector<4x1024xi32>
    %9 = tpu.iota {dimensions = array<i32: 1>} : vector<4x1024xi32>
    %c256_i32 = arith.constant 256 : i32
    %10 = vector.broadcast %c256_i32 : i32 to vector<4x1024xi32>
    %11 = arith.muli %8, %10 : vector<4x1024xi32>
    %12 = arith.cmpi sge, %9, %11 : vector<4x1024xi32>
    %c1_i32 = arith.constant 1 : i32
    %13 = vector.broadcast %c1_i32 : i32 to vector<4x1024xi32>
    %14 = arith.addi %8, %13 : vector<4x1024xi32>
    %c256_i32_6 = arith.constant 256 : i32
    %15 = vector.broadcast %c256_i32_6 : i32 to vector<4x1024xi32>
    %16 = arith.muli %14, %15 : vector<4x1024xi32>
    %17 = arith.cmpi slt, %9, %16 : vector<4x1024xi32>
    %18 = arith.andi %12, %17 : vector<4x1024xi1>
    %cst_7 = arith.constant 3.906250e-03 : f32
    %cst_8 = arith.constant 0.000000e+00 : f32
    %19 = vector.broadcast %cst_7 : f32 to vector<4x1024xf32>
    %20 = vector.broadcast %cst_8 : f32 to vector<4x1024xf32>
    %21 = arith.select %18, %19, %20 : vector<4x1024xi1>, vector<4x1024xf32>
    %cst_9 = arith.constant dense<0.000000e+00> : vector<4x128xf32>
    %22 = tpu.matmul %21, %7, %cst_9 {dimension_numbers = #tpu.dot_dimension_numbers<[1], [0], [0], [1], [0, 0, 1, 1], [], []>} : vector<4x1024xf32>, vector<1024x128xf32>, vector<4x128xf32> -> vector<4x128xf32>
    %23 = vector.extract_strided_slice %22 {offsets = [0, 0], sizes = [2, 128], strides = [1, 1]} : vector<4x128xf32> to vector<2x128xf32>
    %24 = vector.extract_strided_slice %22 {offsets = [2, 0], sizes = [2, 128], strides = [1, 1]} : vector<4x128xf32> to vector<2x128xf32>
    %c0_10 = arith.constant 0 : index
    %c0_11 = arith.constant 0 : index
    %25 = vector.load %arg3[%c0_10, %c0_11] : memref<128x128xf32, #tpu.memory_space<vmem>>, vector<128x128xf32>
    %cst_12 = arith.constant dense<0.000000e+00> : vector<2x128xf32>
    %26 = tpu.matmul %23, %25, %cst_12 {dimension_numbers = #tpu.dot_dimension_numbers<[1], [0], [0], [1], [0, 0, 1, 1], [], []>} : vector<2x128xf32>, vector<128x128xf32>, vector<2x128xf32> -> vector<2x128xf32>
    %c0_13 = arith.constant 0 : index
    %c0_14 = arith.constant 0 : index
    %27 = vector.load %arg4[%c0_13, %c0_14] : memref<128x128xf32, #tpu.memory_space<vmem>>, vector<128x128xf32>
    %cst_15 = arith.constant dense<0.000000e+00> : vector<2x128xf32>
    %28 = tpu.matmul %24, %27, %cst_15 {dimension_numbers = #tpu.dot_dimension_numbers<[1], [0], [0], [1], [0, 0, 1, 1], [], []>} : vector<2x128xf32>, vector<128x128xf32>, vector<2x128xf32> -> vector<2x128xf32>
    %29 = arith.addf %26, %28 : vector<2x128xf32>
    %c0_16 = arith.constant 0 : index
    %c0_17 = arith.constant 0 : index
    %30 = vector.load %arg5[%c0_16, %c0_17] : memref<1x128xf32, #tpu.memory_space<vmem>>, vector<1x128xf32>
    %31 = vector.broadcast %30 : vector<1x128xf32> to vector<2x128xf32>
    %32 = arith.addf %29, %31 : vector<2x128xf32>
    %c0_18 = arith.constant 0 : index
    %c0_19 = arith.constant 0 : index
    %33 = vector.load %arg6[%c0_18, %c0_19] : memref<2x128xf32, #tpu.memory_space<vmem>>, vector<2x128xf32>
    tpu.vector_store %arg6[%c0_18, %c0_19], %32 {strides = array<i32>} : memref<2x128xf32, #tpu.memory_space<vmem>>, vector<2x128xf32>,
    return
  }
}

</mosaic_0001>

<llo_original>
// kernel: va_ranking_forward.1
$region0: #{va_ranking_forward.1}
  #allocation0 [shape = 'u32[]', space=smem, size = 0x4, offset = 0x4, fixed_abs, tag = 'smem constant byte address 0x4 - core index']
  #allocation1 [shape = 'u32[144,128]{1,0:T(1,128)}', space=vmem, size = 0x12000, scoped, tag = 'internal scratch']
  %s0 = inlined_call_operand.vmem [shape: bf16[1024,27], index: 0, kind: input, shape index: {}]
  %s1 = inlined_call_operand.vmem [shape: bf16[27,128], index: 1, kind: input, shape index: {}]
  %s2 = inlined_call_operand.vmem [shape: f32[1,128], index: 2, kind: input, shape index: {}]
  %s3 = inlined_call_operand.vmem [shape: f32[128,128], index: 3, kind: input, shape index: {}]
  %s4 = inlined_call_operand.vmem [shape: f32[128,128], index: 4, kind: input, shape index: {}]
  %s5 = inlined_call_operand.vmem [shape: f32[1,128], index: 5, kind: input, shape index: {}]
  %s6 = inlined_call_operand.vmem [shape: f32[2,128], index: 6, kind: output, shape index: {}]
  %s7 = sld [smem:[#allocation0]]
  $region34: #{va_ranking_forward.1} parent=0
    _
  %s9 = ssub.s32 1, %s7
  %s10 = scalar_select 0, %s9, %s7
  // Predicated region
  $region2: #{va_ranking_forward.1} parent=0 // pred_check
    _
  $region3: #{va_ranking_forward.1} parent=0 // pred_check_branch
    %12 = sbr.rel (0) target = $region5
  $region4: #{va_ranking_forward.1} parent=0 // pred_region
    _
  $region5: #{va_ranking_forward.1} parent=0 // pred_fallthru
    _
  // Predicated region
  $region6: #{va_ranking_forward.1} parent=0 // pred_check
    _
  $region7: #{va_ranking_forward.1} parent=0 // pred_check_branch
    %14 = sbr.rel (0) target = $region9
  $region8: #{va_ranking_forward.1} parent=0 // pred_region
    _
  $region9: #{va_ranking_forward.1} parent=0 // pred_fallthru
    _
  // Predicated region
  $region10: #{va_ranking_forward.1} parent=0 // pred_check
    _
  $region11: #{va_ranking_forward.1} parent=0 // pred_check_branch
    %16 = sbr.rel (0) target = $region13
  $region12: #{va_ranking_forward.1} parent=0 // pred_region
    _
  $region13: #{va_ranking_forward.1} parent=0 // pred_fallthru
    _
  // Predicated region
  $region14: #{va_ranking_forward.1} parent=0 // pred_check
    _
  $region15: #{va_ranking_forward.1} parent=0 // pred_check_branch
    %18 = sbr.rel (0) target = $region17
  $region16: #{va_ranking_forward.1} parent=0 // pred_region
    _
  $region17: #{va_ranking_forward.1} parent=0 // pred_fallthru
    _
  // Predicated region
  $region18: #{va_ranking_forward.1} parent=0 // pred_check
    _
  $region19: #{va_ranking_forward.1} parent=0 // pred_check_branch
    %20 = sbr.rel (0) target = $region21
  $region20: #{va_ranking_forward.1} parent=0 // pred_region
    _
  $region21: #{va_ranking_forward.1} parent=0 // pred_fallthru
    _
  // Predicated region
  $region22: #{va_ranking_forward.1} parent=0 // pred_check
    _
  $region23: #{va_ranking_forward.1} parent=0 // pred_check_branch
    %22 = sbr.rel (0) target = $region25
  $region24: #{va_ranking_forward.1} parent=0 // pred_region
    _
  $region25: #{va_ranking_forward.1} parent=0 // pred_fallthru
    _
  %v24 = vld [vmem:[%s0] sm:$0xf]
  %v25 = vld [vmem:[%s0 + $0x4] sm:$0xf]
  %v26 = vld [vmem:[%s0 + $0x8] sm:$0xf]
  %v27 = vld [vmem:[%s0 + $0xc] sm:$0xf]
  %v28 = vld [vmem:[%s0 + $0x10] sm:$0xf]
  %v29 = vld [vmem:[%s0 + $0x14] sm:$0xf]
  %v30 = vld [vmem:[%s0 + $0x18] sm:$0xf]
  %v31 = vld [vmem:[%s0 + $0x1c] sm:$0xf]
  %v32 = vld [vmem:[%s0 + $0x20] sm:$0xf]
  %v33 = vld [vmem:[%s0 + $0x24] sm:$0xf]
  %v34 = vld [vmem:[%s0 + $0x28] sm:$0xf]
  %v35 = vld [vmem:[%s0 + $0x2c] sm:$0xf]
  %v36 = vld [vmem:[%s0 + $0x30] sm:$0xf]
  %v37 = vld [vmem:[%s0 + $0x34] sm:$0xf]
  %v38 = vld [vmem:[%s0 + $0x38] sm:$0xf]
  %v39 = vld [vmem:[%s0 + $0x3c] sm:$0xf]
  %v40 = vld [vmem:[%s0 + $0x40] sm:$0xf]
  %v41 = vld [vmem:[%s0 + $0x44] sm:$0xf]
  %v42 = vld [vmem:[%s0 + $0x48] sm:$0xf]
  %v43 = vld [vmem:[%s0 + $0x4c] sm:$0xf]
  %v44 = vld [vmem:[%s0 + $0x50] sm:$0xf]
  %v45 = vld [vmem:[%s0 + $0x54] sm:$0xf]
  %v46 = vld [vmem:[%s0 + $0x58] sm:$0xf]
  %v47 = vld [vmem:[%s0 + $0x5c] sm:$0xf]
  %v48 = vld [vmem:[%s0 + $0x60] sm:$0xf]
  %v49 = vld [vmem:[%s0 + $0x64] sm:$0xf]
  %v50 = vld [vmem:[%s0 + $0x68] sm:$0xf]
  %v51 = vld [vmem:[%s0 + $0x6c] sm:$0xf]
  %v52 = vld [vmem:[%s0 + $0x70] sm:$0xf]
  %v53 = vld [vmem:[%s0 + $0x74] sm:$0xf]
  %v54 = vld [vmem:[%s0 + $0x78] sm:$0xf]
  %v55 = vld [vmem:[%s0 + $0x7c] sm:$0xf]
  %v56 = vld [vmem:[%s0 + $0x80] sm:$0xf]
  %v57 = vld [vmem:[%s0 + $0x84] sm:$0xf]
  %v58 = vld [vmem:[%s0 + $0x88] sm:$0xf]
  %v59 = vld [vmem:[%s0 + $0x8c] sm:$0xf]
  %v60 = vld [vmem:[%s0 + $0x90] sm:$0xf]
  %v61 = vld [vmem:[%s0 + $0x94] sm:$0xf]
  %v62 = vld [vmem:[%s0 + $0x98] sm:$0xf]
  %v63 = vld [vmem:[%s0 + $0x9c] sm:$0xf]
  %v64 = vld [vmem:[%s0 + $0xa0] sm:$0xf]
  %v65 = vld [vmem:[%s0 + $0xa4] sm:$0xf]
  %v66 = vld [vmem:[%s0 + $0xa8] sm:$0xf]
  %v67 = vld [vmem:[%s0 + $0xac] sm:$0xf]
  %v68 = vld [vmem:[%s0 + $0xb0] sm:$0xf]
  %v69 = vld [vmem:[%s0 + $0xb4] sm:$0xf]
  %v70 = vld [vmem:[%s0 + $0xb8] sm:$0xf]
  %v71 = vld [vmem:[%s0 + $0xbc] sm:$0xf]
  %v72 = vld [vmem:[%s0 + $0xc0] sm:$0xf]
  %v73 = vld [vmem:[%s0 + $0xc4] sm:$0xf]
  %v74 = vld [vmem:[%s0 + $0xc8] sm:$0xf]
  %v75 = vld [vmem:[%s0 + $0xcc] sm:$0xf]
  %v76 = vld [vmem:[%s0 + $0xd0] sm:$0xf]
  %v77 = vld [vmem:[%s0 + $0xd4] sm:$0xf]
  %v78 = vld [vmem:[%s0 + $0xd8] sm:$0xf]
  %v79 = vld [vmem:[%s0 + $0xdc] sm:$0xf]
  %v80 = vld [vmem:[%s0 + $0xe0] sm:$0xf]
  %v81 = vld [vmem:[%s0 + $0xe4] sm:$0xf]
  %v82 = vld [vmem:[%s0 + $0xe8] sm:$0xf]
  %v83 = vld [vmem:[%s0 + $0xec] sm:$0xf]
  %v84 = vld [vmem:[%s0 + $0xf0] sm:$0xf]
  %v85 = vld [vmem:[%s0 + $0xf4] sm:$0xf]
  %v86 = vld [vmem:[%s0 + $0xf8] sm:$0xf]
  %v87 = vld [vmem:[%s0 + $0xfc] sm:$0xf]
  %v88 = vld [vmem:[%s0 + $0x100] sm:$0xf]
  %v89 = vld [vmem:[%s0 + $0x104] sm:$0xf]
  %v90 = vld [vmem:[%s0 + $0x108] sm:$0xf]
  %v91 = vld [vmem:[%s0 + $0x10c] sm:$0xf]
  %v92 = vld [vmem:[%s0 + $0x110] sm:$0xf]
  %v93 = vld [vmem:[%s0 + $0x114] sm:$0xf]
  %v94 = vld [vmem:[%s0 + $0x118] sm:$0xf]
  %v95 = vld [vmem:[%s0 + $0x11c] sm:$0xf]
  %v96 = vld [vmem:[%s0 + $0x120] sm:$0xf]
  %v97 = vld [vmem:[%s0 + $0x124] sm:$0xf]
  %v98 = vld [vmem:[%s0 + $0x128] sm:$0xf]
  %v99 = vld [vmem:[%s0 + $0x12c] sm:$0xf]
  %v100 = vld [vmem:[%s0 + $0x130] sm:$0xf]
  %v101 = vld [vmem:[%s0 + $0x134] sm:$0xf]
  %v102 = vld [vmem:[%s0 + $0x138] sm:$0xf]
  %v103 = vld [vmem:[%s0 + $0x13c] sm:$0xf]
  %v104 = vld [vmem:[%s0 + $0x140] sm:$0xf]
  %v105 = vld [vmem:[%s0 + $0x144] sm:$0xf]
  %v106 = vld [vmem:[%s0 + $0x148] sm:$0xf]
  %v107 = vld [vmem:[%s0 + $0x14c] sm:$0xf]
  %v108 = vld [vmem:[%s0 + $0x150] sm:$0xf]
  %v109 = vld [vmem:[%s0 + $0x154] sm:$0xf]
  %v110 = vld [vmem:[%s0 + $0x158] sm:$0xf]
  %v111 = vld [vmem:[%s0 + $0x15c] sm:$0xf]
  %v112 = vld [vmem:[%s0 + $0x160] sm:$0xf]
  %v113 = vld [vmem:[%s0 + $0x164] sm:$0xf]
  %v114 = vld [vmem:[%s0 + $0x168] sm:$0xf]
  %v115 = vld [vmem:[%s0 + $0x16c] sm:$0xf]
  %v116 = vld [vmem:[%s0 + $0x170] sm:$0xf]
  %v117 = vld [vmem:[%s0 + $0x174] sm:$0xf]
  %v118 = vld [vmem:[%s0 + $0x178] sm:$0xf]
  %v119 = vld [vmem:[%s0 + $0x17c] sm:$0xf]
  %v120 = vld [vmem:[%s0 + $0x180] sm:$0xf]
  %v121 = vld [vmem:[%s0 + $0x184] sm:$0xf]
  %v122 = vld [vmem:[%s0 + $0x188] sm:$0xf]
  %v123 = vld [vmem:[%s0 + $0x18c] sm:$0xf]
  %v124 = vld [vmem:[%s0 + $0x190] sm:$0xf]
  %v125 = vld [vmem:[%s0 + $0x194] sm:$0xf]
  %v126 = vld [vmem:[%s0 + $0x198] sm:$0xf]
  %v127 = vld [vmem:[%s0 + $0x19c] sm:$0xf]
  %v128 = vld [vmem:[%s0 + $0x1a0] sm:$0xf]
  %v129 = vld [vmem:[%s0 + $0x1a4] sm:$0xf]
  %v130 = vld [vmem:[%s0 + $0x1a8] sm:$0xf]
  %v131 = vld [vmem:[%s0 + $0x1ac] sm:$0xf]
  %v132 = vld [vmem:[%s0 + $0x1b0] sm:$0xf]
  %v133 = vld [vmem:[%s0 + $0x1b4] sm:$0xf]
  %v134 = vld [vmem:[%s0 + $0x1b8] sm:$0xf]
  %v135 = vld [vmem:[%s0 + $0x1bc] sm:$0xf]
  %v136 = vld [vmem:[%s0 + $0x1c0] sm:$0xf]
  %v137 = vld [vmem:[%s0 + $0x1c4] sm:$0xf]
  %v138 = vld [vmem:[%s0 + $0x1c8] sm:$0xf]
  %v139 = vld [vmem:[%s0 + $0x1cc] sm:$0xf]
  %v140 = vld [vmem:[%s0 + $0x1d0] sm:$0xf]
  %v141 = vld [vmem:[%s0 + $0x1d4] sm:$0xf]
  %v142 = vld [vmem:[%s0 + $0x1d8] sm:$0xf]
  %v143 = vld [vmem:[%s0 + $0x1dc] sm:$0xf]
  %v144 = vld [vmem:[%s0 + $0x1e0] sm:$0xf]
  %v145 = vld [vmem:[%s0 + $0x1e4] sm:$0xf]
  %v146 = vld [vmem:[%s0 + $0x1e8] sm:$0xf]
  %v147 = vld [vmem:[%s0 + $0x1ec] sm:$0xf]
  %v148 = vld [vmem:[%s0 + $0x1f0] sm:$0xf]
  %v149 = vld [vmem:[%s0 + $0x1f4] sm:$0xf]
  %v150 = vld [vmem:[%s0 + $0x1f8] sm:$0xf]
  %v151 = vld [vmem:[%s0 + $0x1fc] sm:$0xf]
  %v152 = vld [vmem:[%s1] sm:$0xf]
  %v153 = vld [vmem:[%s1 + $0x4] sm:$0xf]
  %v154 = vld [vmem:[%s1 + $0x8] sm:$0xf]
  %v155 = vld [vmem:[%s1 + $0xc] sm:$0x3]
  %v156 = vld [vmem:[%s2] sm:$0x1]
  %v158 = vlaneseq
  %v159 = vshrl.u32 %v158, 7
  %v160 = vsub.s32 0, %v159
  %v161 = vrot.slane %v156, %v160
  %v291 = vunpack.c.l.b16 %v24
  %v292 = vunpack.c.l.b16 %v25
  %v293 = vunpack.c.l.b16 %v26
  %v294 = vunpack.c.l.b16 %v27
  %v295 = vunpack.c.l.b16 %v28
  %v296 = vunpack.c.l.b16 %v29
  %v297 = vunpack.c.l.b16 %v30
  %v298 = vunpack.c.l.b16 %v31
  %v299 = vunpack.c.l.b16 %v32
  %v300 = vunpack.c.l.b16 %v33
  %v301 = vunpack.c.l.b16 %v34
  %v302 = vunpack.c.l.b16 %v35
  %v303 = vunpack.c.l.b16 %v36
  %v304 = vunpack.c.l.b16 %v37
  %v305 = vunpack.c.l.b16 %v38
  %v306 = vunpack.c.l.b16 %v39
  %v307 = vunpack.c.l.b16 %v40
  %v308 = vunpack.c.l.b16 %v41
  %v309 = vunpack.c.l.b16 %v42
  %v310 = vunpack.c.l.b16 %v43
  %v311 = vunpack.c.l.b16 %v44
  %v312 = vunpack.c.l.b16 %v45
  %v313 = vunpack.c.l.b16 %v46
  %v314 = vunpack.c.l.b16 %v47
  %v315 = vunpack.c.l.b16 %v48
  %v316 = vunpack.c.l.b16 %v49
  %v317 = vunpack.c.l.b16 %v50
  %v318 = vunpack.c.l.b16 %v51
  %v319 = vunpack.c.l.b16 %v52
  %v320 = vunpack.c.l.b16 %v53
  %v321 = vunpack.c.l.b16 %v54
  %v322 = vunpack.c.l.b16 %v55
  %v323 = vunpack.c.l.b16 %v56
  %v324 = vunpack.c.l.b16 %v57
  %v325 = vunpack.c.l.b16 %v58
  %v326 = vunpack.c.l.b16 %v59
  %v327 = vunpack.c.l.b16 %v60
  %v328 = vunpack.c.l.b16 %v61
  %v329 = vunpack.c.l.b16 %v62
  %v330 = vunpack.c.l.b16 %v63
  %v331 = vunpack.c.l.b16 %v64
  %v332 = vunpack.c.l.b16 %v65
  %v333 = vunpack.c.l.b16 %v66
  %v334 = vunpack.c.l.b16 %v67
  %v335 = vunpack.c.l.b16 %v68
  %v336 = vunpack.c.l.b16 %v69
  %v337 = vunpack.c.l.b16 %v70
  %v338 = vunpack.c.l.b16 %v71
  %v339 = vunpack.c.l.b16 %v72
  %v340 = vunpack.c.l.b16 %v73
  %v341 = vunpack.c.l.b16 %v74
  %v342 = vunpack.c.l.b16 %v75
  %v343 = vunpack.c.l.b16 %v76
  %v344 = vunpack.c.l.b16 %v77
  %v345 = vunpack.c.l.b16 %v78
  %v346 = vunpack.c.l.b16 %v79
  %v347 = vunpack.c.l.b16 %v80
  %v348 = vunpack.c.l.b16 %v81
  %v349 = vunpack.c.l.b16 %v82
  %v350 = vunpack.c.l.b16 %v83
  %v351 = vunpack.c.l.b16 %v84
  %v352 = vunpack.c.l.b16 %v85
  %v353 = vunpack.c.l.b16 %v86
  %v354 = vunpack.c.l.b16 %v87
  %v355 = vunpack.c.l.b16 %v88
  %v356 = vunpack.c.l.b16 %v89
  %v357 = vunpack.c.l.b16 %v90
  %v358 = vunpack.c.l.b16 %v91
  %v359 = vunpack.c.l.b16 %v92
  %v360 = vunpack.c.l.b16 %v93
  %v361 = vunpack.c.l.b16 %v94
  %v362 = vunpack.c.l.b16 %v95
  %v363 = vunpack.c.l.b16 %v96
  %v364 = vunpack.c.l.b16 %v97
  %v365 = vunpack.c.l.b16 %v98
  %v366 = vunpack.c.l.b16 %v99
  %v367 = vunpack.c.l.b16 %v100
  %v368 = vunpack.c.l.b16 %v101
  %v369 = vunpack.c.l.b16 %v102
  %v370 = vunpack.c.l.b16 %v103
  %v371 = vunpack.c.l.b16 %v104
  %v372 = vunpack.c.l.b16 %v105
  %v373 = vunpack.c.l.b16 %v106
  %v374 = vunpack.c.l.b16 %v107
  %v375 = vunpack.c.l.b16 %v108
  %v376 = vunpack.c.l.b16 %v109
  %v377 = vunpack.c.l.b16 %v110
  %v378 = vunpack.c.l.b16 %v111
  %v379 = vunpack.c.l.b16 %v112
  %v380 = vunpack.c.l.b16 %v113
  %v381 = vunpack.c.l.b16 %v114
  %v382 = vunpack.c.l.b16 %v115
  %v383 = vunpack.c.l.b16 %v116
  %v384 = vunpack.c.l.b16 %v117
  %v385 = vunpack.c.l.b16 %v118
  %v386 = vunpack.c.l.b16 %v119
  %v387 = vunpack.c.l.b16 %v120
  %v388 = vunpack.c.l.b16 %v121
  %v389 = vunpack.c.l.b16 %v122
  %v390 = vunpack.c.l.b16 %v123
  %v391 = vunpack.c.l.b16 %v124
  %v392 = vunpack.c.l.b16 %v125
  %v393 = vunpack.c.l.b16 %v126
  %v394 = vunpack.c.l.b16 %v127
  %v395 = vunpack.c.l.b16 %v128
  %v396 = vunpack.c.l.b16 %v129
  %v397 = vunpack.c.l.b16 %v130
  %v398 = vunpack.c.l.b16 %v131
  %v399 = vunpack.c.l.b16 %v132
  %v400 = vunpack.c.l.b16 %v133
  %v401 = vunpack.c.l.b16 %v134
  %v402 = vunpack.c.l.b16 %v135
  %v403 = vunpack.c.l.b16 %v136
  %v404 = vunpack.c.l.b16 %v137
  %v405 = vunpack.c.l.b16 %v138
  %v406 = vunpack.c.l.b16 %v139
  %v407 = vunpack.c.l.b16 %v140
  %v408 = vunpack.c.l.b16 %v141
  %v409 = vunpack.c.l.b16 %v142
  %v410 = vunpack.c.l.b16 %v143
  %v411 = vunpack.c.l.b16 %v144
  %v412 = vunpack.c.l.b16 %v145
  %v413 = vunpack.c.l.b16 %v146
  %v414 = vunpack.c.l.b16 %v147
  %v415 = vunpack.c.l.b16 %v148
  %v416 = vunpack.c.l.b16 %v149
  %v417 = vunpack.c.l.b16 %v150
  %v418 = vunpack.c.l.b16 %v151
  %v419 = vpack.c.b16 %v292, %v291
  %v420 = vpack.c.b16 %v294, %v293
  %v421 = vpack.c.b16 %v296, %v295
  %v422 = vpack.c.b16 %v298, %v297
  %v423 = vpack.c.b16 %v300, %v299
  %v424 = vpack.c.b16 %v302, %v301
  %v425 = vpack.c.b16 %v304, %v303
  %v426 = vpack.c.b16 %v306, %v305
  %v427 = vpack.c.b16 %v308, %v307
  %v428 = vpack.c.b16 %v310, %v309
  %v429 = vpack.c.b16 %v312, %v311
  %v430 = vpack.c.b16 %v314, %v313
  %v431 = vpack.c.b16 %v316, %v315
  %v432 = vpack.c.b16 %v318, %v317
  %v433 = vpack.c.b16 %v320, %v319
  %v434 = vpack.c.b16 %v322, %v321
  %v435 = vpack.c.b16 %v324, %v323
  %v436 = vpack.c.b16 %v326, %v325
  %v437 = vpack.c.b16 %v328, %v327
  %v438 = vpack.c.b16 %v330, %v329
  %v439 = vpack.c.b16 %v332, %v331
  %v440 = vpack.c.b16 %v334, %v333
  %v441 = vpack.c.b16 %v336, %v335
  %v442 = vpack.c.b16 %v338, %v337
  %v443 = vpack.c.b16 %v340, %v339
  %v444 = vpack.c.b16 %v342, %v341
  %v445 = vpack.c.b16 %v344, %v343
  %v446 = vpack.c.b16 %v346, %v345
  %v447 = vpack.c.b16 %v348, %v347
  %v448 = vpack.c.b16 %v350, %v349
  %v449 = vpack.c.b16 %v352, %v351
  %v450 = vpack.c.b16 %v354, %v353
  %v451 = vpack.c.b16 %v356, %v355
  %v452 = vpack.c.b16 %v358, %v357
  %v453 = vpack.c.b16 %v360, %v359
  %v454 = vpack.c.b16 %v362, %v361
  %v455 = vpack.c.b16 %v364, %v363
  %v456 = vpack.c.b16 %v366, %v365
  %v457 = vpack.c.b16 %v368, %v367
  %v458 = vpack.c.b16 %v370, %v369
  %v459 = vpack.c.b16 %v372, %v371
  %v460 = vpack.c.b16 %v374, %v373
  %v461 = vpack.c.b16 %v376, %v375
  %v462 = vpack.c.b16 %v378, %v377
  %v463 = vpack.c.b16 %v380, %v379
  %v464 = vpack.c.b16 %v382, %v381
  %v465 = vpack.c.b16 %v384, %v383
  %v466 = vpack.c.b16 %v386, %v385
  %v467 = vpack.c.b16 %v388, %v387
  %v468 = vpack.c.b16 %v390, %v389
  %v469 = vpack.c.b16 %v392, %v391
  %v470 = vpack.c.b16 %v394, %v393
  %v471 = vpack.c.b16 %v396, %v395
  %v472 = vpack.c.b16 %v398, %v397
  %v473 = vpack.c.b16 %v400, %v399
  %v474 = vpack.c.b16 %v402, %v401
  %v475 = vpack.c.b16 %v404, %v403
  %v476 = vpack.c.b16 %v406, %v405
  %v477 = vpack.c.b16 %v408, %v407
  %v478 = vpack.c.b16 %v410, %v409
  %v479 = vpack.c.b16 %v412, %v411
  %v480 = vpack.c.b16 %v414, %v413
  %v481 = vpack.c.b16 %v416, %v415
  %v482 = vpack.c.b16 %v418, %v417
  %v487 = vunpack.c.l.b16 %v152
  %v488 = vunpack.c.l.b16 %v153
  %v489 = vunpack.c.l.b16 %v154
  %v490 = vunpack.c.l.b16 %v155
  %v491 = vpack.c.b16 %v488, %v487
  %v492 = vpack.c.b16 %v490, %v489
  %vm494 = vcmask 220160
  %v496 = vsel %vm494, %v419, 0
  %v499 = vsel %vm494, %v420, 0
  %v502 = vsel %vm494, %v421, 0
  %v505 = vsel %vm494, %v422, 0
  %v508 = vsel %vm494, %v423, 0
  %v511 = vsel %vm494, %v424, 0
  %v514 = vsel %vm494, %v425, 0
  %v517 = vsel %vm494, %v426, 0
  %v520 = vsel %vm494, %v427, 0
  %v523 = vsel %vm494, %v428, 0
  %v526 = vsel %vm494, %v429, 0
  %v529 = vsel %vm494, %v430, 0
  %v532 = vsel %vm494, %v431, 0
  %v535 = vsel %vm494, %v432, 0
  %v538 = vsel %vm494, %v433, 0
  %v541 = vsel %vm494, %v434, 0
  %v544 = vsel %vm494, %v435, 0
  %v547 = vsel %vm494, %v436, 0
  %v550 = vsel %vm494, %v437, 0
  %v553 = vsel %vm494, %v438, 0
  %v556 = vsel %vm494, %v439, 0
  %v559 = vsel %vm494, %v440, 0
  %v562 = vsel %vm494, %v441, 0
  %v565 = vsel %vm494, %v442, 0
  %v568 = vsel %vm494, %v443, 0
  %v571 = vsel %vm494, %v444, 0
  %v574 = vsel %vm494, %v445, 0
  %v577 = vsel %vm494, %v446, 0
  %v580 = vsel %vm494, %v447, 0
  %v583 = vsel %vm494, %v448, 0
  %v586 = vsel %vm494, %v449, 0
  %v589 = vsel %vm494, %v450, 0
  %v592 = vsel %vm494, %v451, 0
  %v595 = vsel %vm494, %v452, 0
  %v598 = vsel %vm494, %v453, 0
  %v601 = vsel %vm494, %v454, 0
  %v604 = vsel %vm494, %v455, 0
  %v607 = vsel %vm494, %v456, 0
  %v610 = vsel %vm494, %v457, 0
  %v613 = vsel %vm494, %v458, 0
  %v616 = vsel %vm494, %v459, 0
  %v619 = vsel %vm494, %v460, 0
  %v622 = vsel %vm494, %v461, 0
  %v625 = vsel %vm494, %v462, 0
  %v628 = vsel %vm494, %v463, 0
  %v631 = vsel %vm494, %v464, 0
  %v634 = vsel %vm494, %v465, 0
  %v637 = vsel %vm494, %v466, 0
  %v640 = vsel %vm494, %v467, 0
  %v643 = vsel %vm494, %v468, 0
  %v646 = vsel %vm494, %v469, 0
  %v649 = vsel %vm494, %v470, 0
  %v652 = vsel %vm494, %v471, 0
  %v655 = vsel %vm494, %v472, 0
  %v658 = vsel %vm494, %v473, 0
  %v661 = vsel %vm494, %v474, 0
  %v664 = vsel %vm494, %v475, 0
  %v667 = vsel %vm494, %v476, 0
  %v670 = vsel %vm494, %v477, 0
  %v673 = vsel %vm494, %v478, 0
  %v676 = vsel %vm494, %v479, 0
  %v679 = vsel %vm494, %v480, 0
  %v682 = vsel %vm494, %v481, 0
  %v685 = vsel %vm494, %v482, 0
  %vm687 = vcmask 1044480
  %vm688 = vcmask 1045504
  %v689 = vsel %vm687, 4294967295, 65535
  %v690 = vsel %vm688, %v689, 0
  %v692 = vand.u32 %v492, %v690
  %694 = vmatprep.subr.bf16.mxu0 0
  %695 = vmatpush1.bf16.msra.mxu0 %v491
  %696 = vmatprep.subr.bf16.mxu0 0
  %697 = vmatpush1.bf16.msra.mxu0 %v692
  %698 = vmatprep.subr.bf16.mxu0 0
  %699 = vmatpush1.bf16.msra.mxu0 0
  %700 = vmatprep.subr.bf16.mxu0 0
  %701 = vmatpush1.bf16.msra.mxu0 0
  %702 = vmatprep.subr.bf16.mxu0 0
  %703 = vmatpush1.bf16.msra.mxu0 0
  %704 = vmatprep.subr.bf16.mxu0 0
  %705 = vmatpush1.bf16.msra.mxu0 0
  %706 = vmatprep.subr.bf16.mxu0 0
  %707 = vmatpush1.bf16.msra.mxu0 0
  %708 = vmatprep.subr.bf16.mxu0 0
  %709 = vmatpush1.bf16.msra.mxu0 0
  %710 = vmatprep.subr.bf16.mxu0 0
  %711 = vmatpush1.bf16.msra.mxu0 0
  %712 = vmatprep.subr.bf16.mxu0 0
  %713 = vmatpush1.bf16.msra.mxu0 0
  %714 = vmatprep.subr.bf16.mxu0 0
  %715 = vmatpush1.bf16.msra.mxu0 0
  %716 = vmatprep.subr.bf16.mxu0 0
  %717 = vmatpush1.bf16.msra.mxu0 0
  %718 = vmatprep.subr.bf16.mxu0 0
  %719 = vmatpush1.bf16.msra.mxu0 0
  %720 = vmatprep.subr.bf16.mxu0 0
  %721 = vmatpush1.bf16.msra.mxu0 0
  %722 = vmatprep.subr.bf16.mxu0 0
  %723 = vmatpush1.bf16.msra.mxu0 0
  %724 = vmatprep.subr.bf16.mxu0 0
  %725 = vmatpush1.bf16.msra.mxu0 0
  %726 = vmatprep.mubr.bf16.mxu0 0
  %727 = vmatmul.mubr.bf16.gmra.mrb[0].mxu0 %v496
  %v728 = vpop.f32.mrb[0].mxu0
  %v729 = vadd.f32 %v161, %v728
  %v730 = vpop.f32.mrb[0].mxu0
  %v731 = vpop.f32.mrb[0].mxu0
  %v732 = vadd.f32 %v161, %v731
  %v733 = vpop.f32.mrb[0].mxu0
  %734 = vmatprep.mubr.bf16.mxu0 0
  %735 = vmatmul.mubr.bf16.gmra.mrb[0].mxu0 %v499
  %v736 = vpop.f32.mrb[0].mxu0
  %v737 = vadd.f32 %v161, %v736
  %v738 = vpop.f32.mrb[0].mxu0
  %v739 = vpop.f32.mrb[0].mxu0
  %v740 = vadd.f32 %v161, %v739
  %v741 = vpop.f32.mrb[0].mxu0
  %742 = vmatprep.mubr.bf16.mxu0 0
  %743 = vmatmul.mubr.bf16.gmra.mrb[0].mxu0 %v502
  %v744 = vpop.f32.mrb[0].mxu0
  %v745 = vadd.f32 %v161, %v744
  %v746 = vpop.f32.mrb[0].mxu0
  %v747 = vpop.f32.mrb[0].mxu0
  %v748 = vadd.f32 %v161, %v747
  %v749 = vpop.f32.mrb[0].mxu0
  %750 = vmatprep.mubr.bf16.mxu0 0
  %751 = vmatmul.mubr.bf16.gmra.mrb[0].mxu0 %v505
  %v752 = vpop.f32.mrb[0].mxu0
  %v753 = vadd.f32 %v161, %v752
  %v754 = vpop.f32.mrb[0].mxu0
  %v755 = vpop.f32.mrb[0].mxu0
  %v756 = vadd.f32 %v161, %v755
  %v757 = vpop.f32.mrb[0].mxu0
  %758 = vmatprep.mubr.bf16.mxu0 0
  %759 = vmatmul.mubr.bf16.gmra.mrb[0].mxu0 %v508
  %v760 = vpop.f32.mrb[0].mxu0
  %v761 = vadd.f32 %v161, %v760
  %v762 = vpop.f32.mrb[0].mxu0
  %v763 = vpop.f32.mrb[0].mxu0
  %v764 = vadd.f32 %v161, %v763
  %v765 = vpop.f32.mrb[0].mxu0
  %766 = vmatprep.mubr.bf16.mxu0 0
  %767 = vmatmul.mubr.bf16.gmra.mrb[0].mxu0 %v511
  %v768 = vpop.f32.mrb[0].mxu0
  %v769 = vadd.f32 %v161, %v768
  %v770 = vpop.f32.mrb[0].mxu0
  %v771 = vpop.f32.mrb[0].mxu0
  %v772 = vadd.f32 %v161, %v771
  %v773 = vpop.f32.mrb[0].mxu0
  %774 = vmatprep.mubr.bf16.mxu0 0
  %775 = vmatmul.mubr.bf16.gmra.mrb[0].mxu0 %v514
  %v776 = vpop.f32.mrb[0].mxu0
  %v777 = vadd.f32 %v161, %v776
  %v778 = vpop.f32.mrb[0].mxu0
  %v779 = vpop.f32.mrb[0].mxu0
  %v780 = vadd.f32 %v161, %v779
  %v781 = vpop.f32.mrb[0].mxu0
  %782 = vmatprep.mubr.bf16.mxu0 0
  %783 = vmatmul.mubr.bf16.gmra.mrb[0].mxu0 %v517
  %v784 = vpop.f32.mrb[0].mxu0
  %v785 = vadd.f32 %v161, %v784
  %v786 = vpop.f32.mrb[0].mxu0
  %v787 = vpop.f32.mrb[0].mxu0
  %v788 = vadd.f32 %v161, %v787
  %v789 = vpop.f32.mrb[0].mxu0
  %790 = vmatprep.mubr.bf16.mxu0 0
  %791 = vmatmul.mubr.bf16.gmra.mrb[0].mxu0 %v520
  %v792 = vpop.f32.mrb[0].mxu0
  %v793 = vadd.f32 %v161, %v792
  %v794 = vpop.f32.mrb[0].mxu0
  %v795 = vpop.f32.mrb[0].mxu0
  %v796 = vadd.f32 %v161, %v795
  %v797 = vpop.f32.mrb[0].mxu0
  %798 = vmatprep.mubr.bf16.mxu0 0
  %799 = vmatmul.mubr.bf16.gmra.mrb[0].mxu0 %v523
  %v800 = vpop.f32.mrb[0].mxu0
  %v801 = vadd.f32 %v161, %v800
  %v802 = vpop.f32.mrb[0].mxu0
  %v803 = vpop.f32.mrb[0].mxu0
  %v804 = vadd.f32 %v161, %v803
  %v805 = vpop.f32.mrb[0].mxu0
  %806 = vmatprep.mubr.bf16.mxu0 0
  %807 = vmatmul.mubr.bf16.gmra.mrb[0].mxu0 %v526
  %v808 = vpop.f32.mrb[0].mxu0
  %v809 = vadd.f32 %v161, %v808
  %v810 = vpop.f32.mrb[0].mxu0
  %v811 = vpop.f32.mrb[0].mxu0
  %v812 = vadd.f32 %v161, %v811
  %v813 = vpop.f32.mrb[0].mxu0
  %814 = vmatprep.mubr.bf16.mxu0 0
  %815 = vmatmul.mubr.bf16.gmra.mrb[0].mxu0 %v529
  %v816 = vpop.f32.mrb[0].mxu0
  %v817 = vadd.f32 %v161, %v816
  %v818 = vpop.f32.mrb[0].mxu0
  %v819 = vpop.f32.mrb[0].mxu0
  %v820 = vadd.f32 %v161, %v819
  %v821 = vpop.f32.mrb[0].mxu0
  %822 = vmatprep.mubr.bf16.mxu0 0
  %823 = vmatmul.mubr.bf16.gmra.mrb[0].mxu0 %v532
  %v824 = vpop.f32.mrb[0].mxu0
  %v825 = vadd.f32 %v161, %v824
  %v826 = vpop.f32.mrb[0].mxu0
  %v827 = vpop.f32.mrb[0].mxu0
  %v828 = vadd.f32 %v161, %v827
  %v829 = vpop.f32.mrb[0].mxu0
  %830 = vmatprep.mubr.bf16.mxu0 0
  %831 = vmatmul.mubr.bf16.gmra.mrb[0].mxu0 %v535
  %v832 = vpop.f32.mrb[0].mxu0
  %v833 = vadd.f32 %v161, %v832
  %v834 = vpop.f32.mrb[0].mxu0
  %v835 = vpop.f32.mrb[0].mxu0
  %v836 = vadd.f32 %v161, %v835
  %v837 = vpop.f32.mrb[0].mxu0
  %838 = vmatprep.mubr.bf16.mxu0 0
  %839 = vmatmul.mubr.bf16.gmra.mrb[0].mxu0 %v538
  %v840 = vpop.f32.mrb[0].mxu0
  %v841 = vadd.f32 %v161, %v840
  %v842 = vpop.f32.mrb[0].mxu0
  %v843 = vpop.f32.mrb[0].mxu0
  %v844 = vadd.f32 %v161, %v843
  %v845 = vpop.f32.mrb[0].mxu0
  %846 = vmatprep.mubr.bf16.mxu0 0
  %847 = vmatmul.mubr.bf16.gmra.mrb[0].mxu0 %v541
  %v848 = vpop.f32.mrb[0].mxu0
  %v849 = vadd.f32 %v161, %v848
  %v850 = vpop.f32.mrb[0].mxu0
  %v851 = vpop.f32.mrb[0].mxu0
  %v852 = vadd.f32 %v161, %v851
  %v853 = vpop.f32.mrb[0].mxu0
  %854 = vmatprep.mubr.bf16.mxu0 0
  %855 = vmatmul.mubr.bf16.gmra.mrb[0].mxu0 %v544
  %v856 = vpop.f32.mrb[0].mxu0
  %v857 = vadd.f32 %v161, %v856
  %v858 = vpop.f32.mrb[0].mxu0
  %v859 = vpop.f32.mrb[0].mxu0
  %v860 = vadd.f32 %v161, %v859
  %v861 = vpop.f32.mrb[0].mxu0
  %862 = vmatprep.mubr.bf16.mxu0 0
  %863 = vmatmul.mubr.bf16.gmra.mrb[0].mxu0 %v547
  %v864 = vpop.f32.mrb[0].mxu0
  %v865 = vadd.f32 %v161, %v864
  %v866 = vpop.f32.mrb[0].mxu0
  %v867 = vpop.f32.mrb[0].mxu0
  %v868 = vadd.f32 %v161, %v867
  %v869 = vpop.f32.mrb[0].mxu0
  %870 = vmatprep.mubr.bf16.mxu0 0
  %871 = vmatmul.mubr.bf16.gmra.mrb[0].mxu0 %v550
  %v872 = vpop.f32.mrb[0].mxu0
  %v873 = vadd.f32 %v161, %v872
  %v874 = vpop.f32.mrb[0].mxu0
  %v875 = vpop.f32.mrb[0].mxu0
  %v876 = vadd.f32 %v161, %v875
  %v877 = vpop.f32.mrb[0].mxu0
  %878 = vmatprep.mubr.bf16.mxu0 0
  %879 = vmatmul.mubr.bf16.gmra.mrb[0].mxu0 %v553
  %v880 = vpop.f32.mrb[0].mxu0
  %v881 = vadd.f32 %v161, %v880
  %v882 = vpop.f32.mrb[0].mxu0
  %v883 = vpop.f32.mrb[0].mxu0
  %v884 = vadd.f32 %v161, %v883
  %v885 = vpop.f32.mrb[0].mxu0
  %886 = vmatprep.mubr.bf16.mxu0 0
  %887 = vmatmul.mubr.bf16.gmra.mrb[0].mxu0 %v556
  %v888 = vpop.f32.mrb[0].mxu0
  %v889 = vadd.f32 %v161, %v888
  %v890 = vpop.f32.mrb[0].mxu0
  %v891 = vpop.f32.mrb[0].mxu0
  %v892 = vadd.f32 %v161, %v891
  %v893 = vpop.f32.mrb[0].mxu0
  %894 = vmatprep.mubr.bf16.mxu0 0
  %895 = vmatmul.mubr.bf16.gmra.mrb[0].mxu0 %v559
  %v896 = vpop.f32.mrb[0].mxu0
  %v897 = vadd.f32 %v161, %v896
  %v898 = vpop.f32.mrb[0].mxu0
  %v899 = vpop.f32.mrb[0].mxu0
  %v900 = vadd.f32 %v161, %v899
  %v901 = vpop.f32.mrb[0].mxu0
  %902 = vmatprep.mubr.bf16.mxu0 0
  %903 = vmatmul.mubr.bf16.gmra.mrb[0].mxu0 %v562
  %v904 = vpop.f32.mrb[0].mxu0
  %v905 = vadd.f32 %v161, %v904
  %v906 = vpop.f32.mrb[0].mxu0
  %v907 = vpop.f32.mrb[0].mxu0
  %v908 = vadd.f32 %v161, %v907
  %v909 = vpop.f32.mrb[0].mxu0
  %910 = vmatprep.mubr.bf16.mxu0 0
  %911 = vmatmul.mubr.bf16.gmra.mrb[0].mxu0 %v565
  %v912 = vpop.f32.mrb[0].mxu0
  %v913 = vadd.f32 %v161, %v912
  %v914 = vpop.f32.mrb[0].mxu0
  %v915 = vpop.f32.mrb[0].mxu0
  %v916 = vadd.f32 %v161, %v915
  %v917 = vpop.f32.mrb[0].mxu0
  %918 = vmatprep.mubr.bf16.mxu0 0
  %919 = vmatmul.mubr.bf16.gmra.mrb[0].mxu0 %v568
  %v920 = vpop.f32.mrb[0].mxu0
  %v921 = vadd.f32 %v161, %v920
  %v922 = vpop.f32.mrb[0].mxu0
  %v923 = vpop.f32.mrb[0].mxu0
  %v924 = vadd.f32 %v161, %v923
  %v925 = vpop.f32.mrb[0].mxu0
  %926 = vmatprep.mubr.bf16.mxu0 0
  %927 = vmatmul.mubr.bf16.gmra.mrb[0].mxu0 %v571
  %v928 = vpop.f32.mrb[0].mxu0
  %v929 = vadd.f32 %v161, %v928
  %v930 = vpop.f32.mrb[0].mxu0
  %v931 = vpop.f32.mrb[0].mxu0
  %v932 = vadd.f32 %v161, %v931
  %v933 = vpop.f32.mrb[0].mxu0
  %934 = vmatprep.mubr.bf16.mxu0 0
  %935 = vmatmul.mubr.bf16.gmra.mrb[0].mxu0 %v574
  %v936 = vpop.f32.mrb[0].mxu0
  %v937 = vadd.f32 %v161, %v936
  %v938 = vpop.f32.mrb[0].mxu0
  %v939 = vpop.f32.mrb[0].mxu0
  %v940 = vadd.f32 %v161, %v939
  %v941 = vpop.f32.mrb[0].mxu0
  %942 = vmatprep.mubr.bf16.mxu0 0
  %943 = vmatmul.mubr.bf16.gmra.mrb[0].mxu0 %v577
  %v944 = vpop.f32.mrb[0].mxu0
  %v945 = vadd.f32 %v161, %v944
  %v946 = vpop.f32.mrb[0].mxu0
  %v947 = vpop.f32.mrb[0].mxu0
  %v948 = vadd.f32 %v161, %v947
  %v949 = vpop.f32.mrb[0].mxu0
  %950 = vmatprep.mubr.bf16.mxu0 0
  %951 = vmatmul.mubr.bf16.gmra.mrb[0].mxu0 %v580
  %v952 = vpop.f32.mrb[0].mxu0
  %v953 = vadd.f32 %v161, %v952
  %v954 = vpop.f32.mrb[0].mxu0
  %v955 = vpop.f32.mrb[0].mxu0
  %v956 = vadd.f32 %v161, %v955
  %v957 = vpop.f32.mrb[0].mxu0
  %958 = vmatprep.mubr.bf16.mxu0 0
  %959 = vmatmul.mubr.bf16.gmra.mrb[0].mxu0 %v583
  %v960 = vpop.f32.mrb[0].mxu0
  %v961 = vadd.f32 %v161, %v960
  %v962 = vpop.f32.mrb[0].mxu0
  %v963 = vpop.f32.mrb[0].mxu0
  %v964 = vadd.f32 %v161, %v963
  %v965 = vpop.f32.mrb[0].mxu0
  %966 = vmatprep.mubr.bf16.mxu0 0
  %967 = vmatmul.mubr.bf16.gmra.mrb[0].mxu0 %v586
  %v968 = vpop.f32.mrb[0].mxu0
  %v969 = vadd.f32 %v161, %v968
  %v970 = vpop.f32.mrb[0].mxu0
  %v971 = vpop.f32.mrb[0].mxu0
  %v972 = vadd.f32 %v161, %v971
  %v973 = vpop.f32.mrb[0].mxu0
  %974 = vmatprep.mubr.bf16.mxu0 0
  %975 = vmatmul.mubr.bf16.gmra.mrb[0].mxu0 %v589
  %v976 = vpop.f32.mrb[0].mxu0
  %v977 = vadd.f32 %v161, %v976
  %v978 = vpop.f32.mrb[0].mxu0
  %v979 = vpop.f32.mrb[0].mxu0
  %v980 = vadd.f32 %v161, %v979
  %v981 = vpop.f32.mrb[0].mxu0
  %982 = vmatprep.mubr.bf16.mxu0 0
  %983 = vmatmul.mubr.bf16.gmra.mrb[0].mxu0 %v592
  %v984 = vpop.f32.mrb[0].mxu0
  %v985 = vadd.f32 %v161, %v984
  %v986 = vpop.f32.mrb[0].mxu0
  %v987 = vpop.f32.mrb[0].mxu0
  %v988 = vadd.f32 %v161, %v987
  %v989 = vpop.f32.mrb[0].mxu0
  %990 = vmatprep.mubr.bf16.mxu0 0
  %991 = vmatmul.mubr.bf16.gmra.mrb[0].mxu0 %v595
  %v992 = vpop.f32.mrb[0].mxu0
  %v993 = vadd.f32 %v161, %v992
  %v994 = vpop.f32.mrb[0].mxu0
  %v995 = vpop.f32.mrb[0].mxu0
  %v996 = vadd.f32 %v161, %v995
  %v997 = vpop.f32.mrb[0].mxu0
  %998 = vmatprep.mubr.bf16.mxu0 0
  %999 = vmatmul.mubr.bf16.gmra.mrb[0].mxu0 %v598
  %v1000 = vpop.f32.mrb[0].mxu0
  %v1001 = vadd.f32 %v161, %v1000
  %v1002 = vpop.f32.mrb[0].mxu0
  %v1003 = vpop.f32.mrb[0].mxu0
  %v1004 = vadd.f32 %v161, %v1003
  %v1005 = vpop.f32.mrb[0].mxu0
  %1006 = vmatprep.mubr.bf16.mxu0 0
  %1007 = vmatmul.mubr.bf16.gmra.mrb[0].mxu0 %v601
  %v1008 = vpop.f32.mrb[0].mxu0
  %v1009 = vadd.f32 %v161, %v1008
  %v1010 = vpop.f32.mrb[0].mxu0
  %v1011 = vpop.f32.mrb[0].mxu0
  %v1012 = vadd.f32 %v161, %v1011
  %v1013 = vpop.f32.mrb[0].mxu0
  %1014 = vmatprep.mubr.bf16.mxu0 0
  %1015 = vmatmul.mubr.bf16.gmra.mrb[0].mxu0 %v604
  %v1016 = vpop.f32.mrb[0].mxu0
  %v1017 = vadd.f32 %v161, %v1016
  %v1018 = vpop.f32.mrb[0].mxu0
  %v1019 = vpop.f32.mrb[0].mxu0
  %v1020 = vadd.f32 %v161, %v1019
  %v1021 = vpop.f32.mrb[0].mxu0
  %1022 = vmatprep.mubr.bf16.mxu0 0
  %1023 = vmatmul.mubr.bf16.gmra.mrb[0].mxu0 %v607
  %v1024 = vpop.f32.mrb[0].mxu0
  %v1025 = vadd.f32 %v161, %v1024
  %v1026 = vpop.f32.mrb[0].mxu0
  %v1027 = vpop.f32.mrb[0].mxu0
  %v1028 = vadd.f32 %v161, %v1027
  %v1029 = vpop.f32.mrb[0].mxu0
  %1030 = vmatprep.mubr.bf16.mxu0 0
  %1031 = vmatmul.mubr.bf16.gmra.mrb[0].mxu0 %v610
  %v1032 = vpop.f32.mrb[0].mxu0
  %v1033 = vadd.f32 %v161, %v1032
  %v1034 = vpop.f32.mrb[0].mxu0
  %v1035 = vpop.f32.mrb[0].mxu0
  %v1036 = vadd.f32 %v161, %v1035
  %v1037 = vpop.f32.mrb[0].mxu0
  %1038 = vmatprep.mubr.bf16.mxu0 0
  %1039 = vmatmul.mubr.bf16.gmra.mrb[0].mxu0 %v613
  %v1040 = vpop.f32.mrb[0].mxu0
  %v1041 = vadd.f32 %v161, %v1040
  %v1042 = vpop.f32.mrb[0].mxu0
  %v1043 = vpop.f32.mrb[0].mxu0
  %v1044 = vadd.f32 %v161, %v1043
  %v1045 = vpop.f32.mrb[0].mxu0
  %1046 = vmatprep.mubr.bf16.mxu0 0
  %1047 = vmatmul.mubr.bf16.gmra.mrb[0].mxu0 %v616
  %v1048 = vpop.f32.mrb[0].mxu0
  %v1049 = vadd.f32 %v161, %v1048
  %v1050 = vpop.f32.mrb[0].mxu0
  %v1051 = vpop.f32.mrb[0].mxu0
  %v1052 = vadd.f32 %v161, %v1051
  %v1053 = vpop.f32.mrb[0].mxu0
  %1054 = vmatprep.mubr.bf16.mxu0 0
  %1055 = vmatmul.mubr.bf16.gmra.mrb[0].mxu0 %v619
  %v1056 = vpop.f32.mrb[0].mxu0
  %v1057 = vadd.f32 %v161, %v1056
  %v1058 = vpop.f32.mrb[0].mxu0
  %v1059 = vpop.f32.mrb[0].mxu0
  %v1060 = vadd.f32 %v161, %v1059
  %v1061 = vpop.f32.mrb[0].mxu0
  %1062 = vmatprep.mubr.bf16.mxu0 0
  %1063 = vmatmul.mubr.bf16.gmra.mrb[0].mxu0 %v622
  %v1064 = vpop.f32.mrb[0].mxu0
  %v1065 = vadd.f32 %v161, %v1064
  %v1066 = vpop.f32.mrb[0].mxu0
  %v1067 = vpop.f32.mrb[0].mxu0
  %v1068 = vadd.f32 %v161, %v1067
  %v1069 = vpop.f32.mrb[0].mxu0
  %1070 = vmatprep.mubr.bf16.mxu0 0
  %1071 = vmatmul.mubr.bf16.gmra.mrb[0].mxu0 %v625
  %v1072 = vpop.f32.mrb[0].mxu0
  %v1073 = vadd.f32 %v161, %v1072
  %v1074 = vpop.f32.mrb[0].mxu0
  %v1075 = vpop.f32.mrb[0].mxu0
  %v1076 = vadd.f32 %v161, %v1075
  %v1077 = vpop.f32.mrb[0].mxu0
  %1078 = vmatprep.mubr.bf16.mxu0 0
  %1079 = vmatmul.mubr.bf16.gmra.mrb[0].mxu0 %v628
  %v1080 = vpop.f32.mrb[0].mxu0
  %v1081 = vadd.f32 %v161, %v1080
  %v1082 = vpop.f32.mrb[0].mxu0
  %v1083 = vpop.f32.mrb[0].mxu0
  %v1084 = vadd.f32 %v161, %v1083
  %v1085 = vpop.f32.mrb[0].mxu0
  %1086 = vmatprep.mubr.bf16.mxu0 0
  %1087 = vmatmul.mubr.bf16.gmra.mrb[0].mxu0 %v631
  %v1088 = vpop.f32.mrb[0].mxu0
  %v1089 = vadd.f32 %v161, %v1088
  %v1090 = vpop.f32.mrb[0].mxu0
  %v1091 = vpop.f32.mrb[0].mxu0
  %v1092 = vadd.f32 %v161, %v1091
  %v1093 = vpop.f32.mrb[0].mxu0
  %1094 = vmatprep.mubr.bf16.mxu0 0
  %1095 = vmatmul.mubr.bf16.gmra.mrb[0].mxu0 %v634
  %v1096 = vpop.f32.mrb[0].mxu0
  %v1097 = vadd.f32 %v161, %v1096
  %v1098 = vpop.f32.mrb[0].mxu0
  %v1099 = vpop.f32.mrb[0].mxu0
  %v1100 = vadd.f32 %v161, %v1099
  %v1101 = vpop.f32.mrb[0].mxu0
  %1102 = vmatprep.mubr.bf16.mxu0 0
  %1103 = vmatmul.mubr.bf16.gmra.mrb[0].mxu0 %v637
  %v1104 = vpop.f32.mrb[0].mxu0
  %v1105 = vadd.f32 %v161, %v1104
  %v1106 = vpop.f32.mrb[0].mxu0
  %v1107 = vpop.f32.mrb[0].mxu0
  %v1108 = vadd.f32 %v161, %v1107
  %v1109 = vpop.f32.mrb[0].mxu0
  %1110 = vmatprep.mubr.bf16.mxu0 0
  %1111 = vmatmul.mubr.bf16.gmra.mrb[0].mxu0 %v640
  %v1112 = vpop.f32.mrb[0].mxu0
  %v1113 = vadd.f32 %v161, %v1112
  %v1114 = vpop.f32.mrb[0].mxu0
  %v1115 = vpop.f32.mrb[0].mxu0
  %v1116 = vadd.f32 %v161, %v1115
  %v1117 = vpop.f32.mrb[0].mxu0
  %1118 = vmatprep.mubr.bf16.mxu0 0
  %1119 = vmatmul.mubr.bf16.gmra.mrb[0].mxu0 %v643
  %v1120 = vpop.f32.mrb[0].mxu0
  %v1121 = vadd.f32 %v161, %v1120
  %v1122 = vpop.f32.mrb[0].mxu0
  %v1123 = vpop.f32.mrb[0].mxu0
  %v1124 = vadd.f32 %v161, %v1123
  %v1125 = vpop.f32.mrb[0].mxu0
  %1126 = vmatprep.mubr.bf16.mxu0 0
  %1127 = vmatmul.mubr.bf16.gmra.mrb[0].mxu0 %v646
  %v1128 = vpop.f32.mrb[0].mxu0
  %v1129 = vadd.f32 %v161, %v1128
  %v1130 = vpop.f32.mrb[0].mxu0
  %v1131 = vpop.f32.mrb[0].mxu0
  %v1132 = vadd.f32 %v161, %v1131
  %v1133 = vpop.f32.mrb[0].mxu0
  %1134 = vmatprep.mubr.bf16.mxu0 0
  %1135 = vmatmul.mubr.bf16.gmra.mrb[0].mxu0 %v649
  %v1136 = vpop.f32.mrb[0].mxu0
  %v1137 = vadd.f32 %v161, %v1136
  %v1138 = vpop.f32.mrb[0].mxu0
  %v1139 = vpop.f32.mrb[0].mxu0
  %v1140 = vadd.f32 %v161, %v1139
  %v1141 = vpop.f32.mrb[0].mxu0
  %1142 = vmatprep.mubr.bf16.mxu0 0
  %1143 = vmatmul.mubr.bf16.gmra.mrb[0].mxu0 %v652
  %v1144 = vpop.f32.mrb[0].mxu0
  %v1145 = vadd.f32 %v161, %v1144
  %v1146 = vpop.f32.mrb[0].mxu0
  %v1147 = vpop.f32.mrb[0].mxu0
  %v1148 = vadd.f32 %v161, %v1147
  %v1149 = vpop.f32.mrb[0].mxu0
  %1150 = vmatprep.mubr.bf16.mxu0 0
  %1151 = vmatmul.mubr.bf16.gmra.mrb[0].mxu0 %v655
  %v1152 = vpop.f32.mrb[0].mxu0
  %v1153 = vadd.f32 %v161, %v1152
  %v1154 = vpop.f32.mrb[0].mxu0
  %v1155 = vpop.f32.mrb[0].mxu0
  %v1156 = vadd.f32 %v161, %v1155
  %v1157 = vpop.f32.mrb[0].mxu0
  %1158 = vmatprep.mubr.bf16.mxu0 0
  %1159 = vmatmul.mubr.bf16.gmra.mrb[0].mxu0 %v658
  %v1160 = vpop.f32.mrb[0].mxu0
  %v1161 = vadd.f32 %v161, %v1160
  %v1162 = vpop.f32.mrb[0].mxu0
  %v1163 = vpop.f32.mrb[0].mxu0
  %v1164 = vadd.f32 %v161, %v1163
  %v1165 = vpop.f32.mrb[0].mxu0
  %1166 = vmatprep.mubr.bf16.mxu0 0
  %1167 = vmatmul.mubr.bf16.gmra.mrb[0].mxu0 %v661
  %v1168 = vpop.f32.mrb[0].mxu0
  %v1169 = vadd.f32 %v161, %v1168
  %v1170 = vpop.f32.mrb[0].mxu0
  %v1171 = vpop.f32.mrb[0].mxu0
  %v1172 = vadd.f32 %v161, %v1171
  %v1173 = vpop.f32.mrb[0].mxu0
  %1174 = vmatprep.mubr.bf16.mxu0 0
  %1175 = vmatmul.mubr.bf16.gmra.mrb[0].mxu0 %v664
  %v1176 = vpop.f32.mrb[0].mxu0
  %v1177 = vadd.f32 %v161, %v1176
  %v1178 = vpop.f32.mrb[0].mxu0
  %v1179 = vpop.f32.mrb[0].mxu0
  %v1180 = vadd.f32 %v161, %v1179
  %v1181 = vpop.f32.mrb[0].mxu0
  %1182 = vmatprep.mubr.bf16.mxu0 0
  %1183 = vmatmul.mubr.bf16.gmra.mrb[0].mxu0 %v667
  %v1184 = vpop.f32.mrb[0].mxu0
  %v1185 = vadd.f32 %v161, %v1184
  %v1186 = vpop.f32.mrb[0].mxu0
  %v1187 = vpop.f32.mrb[0].mxu0
  %v1188 = vadd.f32 %v161, %v1187
  %v1189 = vpop.f32.mrb[0].mxu0
  %1190 = vmatprep.mubr.bf16.mxu0 0
  %1191 = vmatmul.mubr.bf16.gmra.mrb[0].mxu0 %v670
  %v1192 = vpop.f32.mrb[0].mxu0
  %v1193 = vadd.f32 %v161, %v1192
  %v1194 = vpop.f32.mrb[0].mxu0
  %v1195 = vpop.f32.mrb[0].mxu0
  %v1196 = vadd.f32 %v161, %v1195
  %v1197 = vpop.f32.mrb[0].mxu0
  %1198 = vmatprep.mubr.bf16.mxu0 0
  %1199 = vmatmul.mubr.bf16.gmra.mrb[0].mxu0 %v673
  %v1200 = vpop.f32.mrb[0].mxu0
  %v1201 = vadd.f32 %v161, %v1200
  %v1202 = vpop.f32.mrb[0].mxu0
  %v1203 = vpop.f32.mrb[0].mxu0
  %v1204 = vadd.f32 %v161, %v1203
  %v1205 = vpop.f32.mrb[0].mxu0
  %1206 = vmatprep.mubr.bf16.mxu0 0
  %1207 = vmatmul.mubr.bf16.gmra.mrb[0].mxu0 %v676
  %v1208 = vpop.f32.mrb[0].mxu0
  %v1209 = vadd.f32 %v161, %v1208
  %v1210 = vpop.f32.mrb[0].mxu0
  %v1211 = vpop.f32.mrb[0].mxu0
  %v1212 = vadd.f32 %v161, %v1211
  %v1213 = vpop.f32.mrb[0].mxu0
  %1214 = vmatprep.mubr.bf16.mxu0 0
  %1215 = vmatmul.mubr.bf16.gmra.mrb[0].mxu0 %v679
  %v1216 = vpop.f32.mrb[0].mxu0
  %v1217 = vadd.f32 %v161, %v1216
  %v1218 = vpop.f32.mrb[0].mxu0
  %v1219 = vpop.f32.mrb[0].mxu0
  %v1220 = vadd.f32 %v161, %v1219
  %v1221 = vpop.f32.mrb[0].mxu0
  %1222 = vmatprep.mubr.bf16.mxu0 0
  %1223 = vmatmul.mubr.bf16.gmra.mrb[0].mxu0 %v682
  %v1224 = vpop.f32.mrb[0].mxu0
  %v1225 = vadd.f32 %v161, %v1224
  %v1226 = vpop.f32.mrb[0].mxu0
  %v1227 = vpop.f32.mrb[0].mxu0
  %v1228 = vadd.f32 %v161, %v1227
  %v1229 = vpop.f32.mrb[0].mxu0
  %1230 = vmatprep.mubr.bf16.mxu0 0
  %1231 = vmatmul.mubr.bf16.gmra.mrb[0].mxu0 %v685
  %v1232 = vpop.f32.mrb[0].mxu0
  %v1233 = vadd.f32 %v161, %v1232
  %v1234 = vpop.f32.mrb[0].mxu0
  %v1235 = vpop.f32.mrb[0].mxu0
  %v1236 = vadd.f32 %v161, %v1235
  %v1237 = vpop.f32.mrb[0].mxu0
  %1238 = vdwg.mxu0
  %v1239 = vmax.f32 %v729, 0.0
  %v1240 = vmax.f32 %v732, 0.0
  %v1241 = vmax.f32 %v737, 0.0
  %v1242 = vmax.f32 %v740, 0.0
  %v1243 = vmax.f32 %v745, 0.0
  %v1244 = vmax.f32 %v748, 0.0
  %v1245 = vmax.f32 %v753, 0.0
  %v1246 = vmax.f32 %v756, 0.0
  %v1247 = vmax.f32 %v761, 0.0
  %v1248 = vmax.f32 %v764, 0.0
  %v1249 = vmax.f32 %v769, 0.0
  %v1250 = vmax.f32 %v772, 0.0
  %v1251 = vmax.f32 %v777, 0.0
  %v1252 = vmax.f32 %v780, 0.0
  %v1253 = vmax.f32 %v785, 0.0
  %v1254 = vmax.f32 %v788, 0.0
  %v1255 = vmax.f32 %v793, 0.0
  %v1256 = vmax.f32 %v796, 0.0
  %v1257 = vmax.f32 %v801, 0.0
  %v1258 = vmax.f32 %v804, 0.0
  %v1259 = vmax.f32 %v809, 0.0
  %v1260 = vmax.f32 %v812, 0.0
  %v1261 = vmax.f32 %v817, 0.0
  %v1262 = vmax.f32 %v820, 0.0
  %v1263 = vmax.f32 %v825, 0.0
  %v1264 = vmax.f32 %v828, 0.0
  %v1265 = vmax.f32 %v833, 0.0
  %v1266 = vmax.f32 %v836, 0.0
  %v1267 = vmax.f32 %v841, 0.0
  %v1268 = vmax.f32 %v844, 0.0
  %v1269 = vmax.f32 %v849, 0.0
  %v1270 = vmax.f32 %v852, 0.0
  %v1271 = vmax.f32 %v857, 0.0
  %v1272 = vmax.f32 %v860, 0.0
  %v1273 = vmax.f32 %v865, 0.0
  %v1274 = vmax.f32 %v868, 0.0
  %v1275 = vmax.f32 %v873, 0.0
  %v1276 = vmax.f32 %v876, 0.0
  %v1277 = vmax.f32 %v881, 0.0
  %v1278 = vmax.f32 %v884, 0.0
  %v1279 = vmax.f32 %v889, 0.0
  %v1280 = vmax.f32 %v892, 0.0
  %v1281 = vmax.f32 %v897, 0.0
  %v1282 = vmax.f32 %v900, 0.0
  %v1283 = vmax.f32 %v905, 0.0
  %v1284 = vmax.f32 %v908, 0.0
  %v1285 = vmax.f32 %v913, 0.0
  %v1286 = vmax.f32 %v916, 0.0
  %v1287 = vmax.f32 %v921, 0.0
  %v1288 = vmax.f32 %v924, 0.0
  %v1289 = vmax.f32 %v929, 0.0
  %v1290 = vmax.f32 %v932, 0.0
  %v1291 = vmax.f32 %v937, 0.0
  %v1292 = vmax.f32 %v940, 0.0
  %v1293 = vmax.f32 %v945, 0.0
  %v1294 = vmax.f32 %v948, 0.0
  %v1295 = vmax.f32 %v953, 0.0
  %v1296 = vmax.f32 %v956, 0.0
  %v1297 = vmax.f32 %v961, 0.0
  %v1298 = vmax.f32 %v964, 0.0
  %v1299 = vmax.f32 %v969, 0.0
  %v1300 = vmax.f32 %v972, 0.0
  %v1301 = vmax.f32 %v977, 0.0
  %v1302 = vmax.f32 %v980, 0.0
  %v1303 = vmax.f32 %v985, 0.0
  %v1304 = vmax.f32 %v988, 0.0
  %v1305 = vmax.f32 %v993, 0.0
  %v1306 = vmax.f32 %v996, 0.0
  %v1307 = vmax.f32 %v1001, 0.0
  %v1308 = vmax.f32 %v1004, 0.0
  %v1309 = vmax.f32 %v1009, 0.0
  %v1310 = vmax.f32 %v1012, 0.0
  %v1311 = vmax.f32 %v1017, 0.0
  %v1312 = vmax.f32 %v1020, 0.0
  %v1313 = vmax.f32 %v1025, 0.0
  %v1314 = vmax.f32 %v1028, 0.0
  %v1315 = vmax.f32 %v1033, 0.0
  %v1316 = vmax.f32 %v1036, 0.0
  %v1317 = vmax.f32 %v1041, 0.0
  %v1318 = vmax.f32 %v1044, 0.0
  %v1319 = vmax.f32 %v1049, 0.0
  %v1320 = vmax.f32 %v1052, 0.0
  %v1321 = vmax.f32 %v1057, 0.0
  %v1322 = vmax.f32 %v1060, 0.0
  %v1323 = vmax.f32 %v1065, 0.0
  %v1324 = vmax.f32 %v1068, 0.0
  %v1325 = vmax.f32 %v1073, 0.0
  %v1326 = vmax.f32 %v1076, 0.0
  %v1327 = vmax.f32 %v1081, 0.0
  %v1328 = vmax.f32 %v1084, 0.0
  %v1329 = vmax.f32 %v1089, 0.0
  %v1330 = vmax.f32 %v1092, 0.0
  %v1331 = vmax.f32 %v1097, 0.0
  %v1332 = vmax.f32 %v1100, 0.0
  %v1333 = vmax.f32 %v1105, 0.0
  %v1334 = vmax.f32 %v1108, 0.0
  %v1335 = vmax.f32 %v1113, 0.0
  %v1336 = vmax.f32 %v1116, 0.0
  %v1337 = vmax.f32 %v1121, 0.0
  %v1338 = vmax.f32 %v1124, 0.0
  %v1339 = vmax.f32 %v1129, 0.0
  %v1340 = vmax.f32 %v1132, 0.0
  %v1341 = vmax.f32 %v1137, 0.0
  %v1342 = vmax.f32 %v1140, 0.0
  %v1343 = vmax.f32 %v1145, 0.0
  %v1344 = vmax.f32 %v1148, 0.0
  %v1345 = vmax.f32 %v1153, 0.0
  %v1346 = vmax.f32 %v1156, 0.0
  %v1347 = vmax.f32 %v1161, 0.0
  %v1348 = vmax.f32 %v1164, 0.0
  %v1349 = vmax.f32 %v1169, 0.0
  %v1350 = vmax.f32 %v1172, 0.0
  %v1351 = vmax.f32 %v1177, 0.0
  %v1352 = vmax.f32 %v1180, 0.0
  %v1353 = vmax.f32 %v1185, 0.0
  %v1354 = vmax.f32 %v1188, 0.0
  %v1355 = vmax.f32 %v1193, 0.0
  %v1356 = vmax.f32 %v1196, 0.0
  %v1357 = vmax.f32 %v1201, 0.0
  %v1358 = vmax.f32 %v1204, 0.0
  %v1359 = vmax.f32 %v1209, 0.0
  %v1360 = vmax.f32 %v1212, 0.0
  %v1361 = vmax.f32 %v1217, 0.0
  %v1362 = vmax.f32 %v1220, 0.0
  %v1363 = vmax.f32 %v1225, 0.0
  %v1364 = vmax.f32 %v1228, 0.0
  %v1365 = vmax.f32 %v1233, 0.0
  %v1366 = vmax.f32 %v1236, 0.0
  %v1367 = vlaneseq
  %v1368 = vshrl.u32 %v1367, 7
  %v1369 = vlaneseq
  %v1370 = vand.u32 %v1369, 127
  %v1371 = vadd.s32 %v1370, 128
  %v1372 = vadd.s32 %v1370, 256
  %v1373 = vadd.s32 %v1370, 384
  %v1374 = vadd.s32 %v1370, 512
  %v1375 = vadd.s32 %v1370, 640
  %v1376 = vadd.s32 %v1370, 768
  %v1377 = vadd.s32 %v1370, 896
  %v1378 = vmul.u32 %v1368, 256
  %vm1379 = vcmp.ge.s32.totalorder %v1370, %v1378
  %vm1380 = vcmp.ge.s32.totalorder %v1371, %v1378
  %vm1381 = vcmp.ge.s32.totalorder %v1372, %v1378
  %vm1382 = vcmp.ge.s32.totalorder %v1373, %v1378
  %vm1383 = vcmp.ge.s32.totalorder %v1374, %v1378
  %vm1384 = vcmp.ge.s32.totalorder %v1375, %v1378
  %vm1385 = vcmp.ge.s32.totalorder %v1376, %v1378
  %vm1386 = vcmp.ge.s32.totalorder %v1377, %v1378
  %v1387 = vadd.s32 %v1368, 1
  %v1388 = vmul.u32 %v1387, 256
  %vm1389 = vcmp.lt.s32.totalorder %v1370, %v1388
  %vm1390 = vcmp.lt.s32.totalorder %v1371, %v1388
  %vm1391 = vcmp.lt.s32.totalorder %v1372, %v1388
  %vm1392 = vcmp.lt.s32.totalorder %v1373, %v1388
  %vm1393 = vcmp.lt.s32.totalorder %v1374, %v1388
  %vm1394 = vcmp.lt.s32.totalorder %v1375, %v1388
  %vm1395 = vcmp.lt.s32.totalorder %v1376, %v1388
  %vm1396 = vcmp.lt.s32.totalorder %v1377, %v1388
  %vm1397 = vmand %vm1379, %vm1389
  %vm1398 = vmand %vm1380, %vm1390
  %vm1399 = vmand %vm1381, %vm1391
  %vm1400 = vmand %vm1382, %vm1392
  %vm1401 = vmand %vm1383, %vm1393
  %vm1402 = vmand %vm1384, %vm1394
  %vm1403 = vmand %vm1385, %vm1395
  %vm1404 = vmand %vm1386, %vm1396
  %v1405 = vsel %vm1397, 0.00390625, 0.0
  %v1406 = vsel %vm1398, 0.00390625, 0.0
  %v1407 = vsel %vm1399, 0.00390625, 0.0
  %v1408 = vsel %vm1400, 0.00390625, 0.0
  %v1409 = vsel %vm1401, 0.00390625, 0.0
  %v1410 = vsel %vm1402, 0.00390625, 0.0
  %v1411 = vsel %vm1403, 0.00390625, 0.0
  %v1412 = vsel %vm1404, 0.00390625, 0.0
  %1413 = vmatprep.subr.mxu0 0.0
  %1414 = vmatpush1.msra.mxu0 %v1239
  %1415 = vmatprep.subr.mxu0 0.0
  %1416 = vmatpush1.msra.mxu0 %v1240
  %1417 = vmatprep.subr.mxu0 0.0
  %1418 = vmatpush1.msra.mxu0 %v1241
  %1419 = vmatprep.subr.mxu0 0.0
  %1420 = vmatpush1.msra.mxu0 %v1242
  %1421 = vmatprep.subr.mxu0 0.0
  %1422 = vmatpush1.msra.mxu0 %v1243
  %1423 = vmatprep.subr.mxu0 0.0
  %1424 = vmatpush1.msra.mxu0 %v1244
  %1425 = vmatprep.subr.mxu0 0.0
  %1426 = vmatpush1.msra.mxu0 %v1245
  %1427 = vmatprep.subr.mxu0 0.0
  %1428 = vmatpush1.msra.mxu0 %v1246
  %1429 = vmatprep.subr.mxu0 0.0
  %1430 = vmatpush1.msra.mxu0 %v1247
  %1431 = vmatprep.subr.mxu0 0.0
  %1432 = vmatpush1.msra.mxu0 %v1248
  %1433 = vmatprep.subr.mxu0 0.0
  %1434 = vmatpush1.msra.mxu0 %v1249
  %1435 = vmatprep.subr.mxu0 0.0
  %1436 = vmatpush1.msra.mxu0 %v1250
  %1437 = vmatprep.subr.mxu0 0.0
  %1438 = vmatpush1.msra.mxu0 %v1251
  %1439 = vmatprep.subr.mxu0 0.0
  %1440 = vmatpush1.msra.mxu0 %v1252
  %1441 = vmatprep.subr.mxu0 0.0
  %1442 = vmatpush1.msra.mxu0 %v1253
  %1443 = vmatprep.subr.mxu0 0.0
  %1444 = vmatpush1.msra.mxu0 %v1254
  %1445 = vmatprep.subr.mxu0 0.0
  %1446 = vmatpush1.msra.mxu0 %v1255
  %1447 = vmatprep.subr.mxu0 0.0
  %1448 = vmatpush1.msra.mxu0 %v1256
  %1449 = vmatprep.subr.mxu0 0.0
  %1450 = vmatpush1.msra.mxu0 %v1257
  %1451 = vmatprep.subr.mxu0 0.0
  %1452 = vmatpush1.msra.mxu0 %v1258
  %1453 = vmatprep.subr.mxu0 0.0
  %1454 = vmatpush1.msra.mxu0 %v1259
  %1455 = vmatprep.subr.mxu0 0.0
  %1456 = vmatpush1.msra.mxu0 %v1260
  %1457 = vmatprep.subr.mxu0 0.0
  %1458 = vmatpush1.msra.mxu0 %v1261
  %1459 = vmatprep.subr.mxu0 0.0
  %1460 = vmatpush1.msra.mxu0 %v1262
  %1461 = vmatprep.subr.mxu0 0.0
  %1462 = vmatpush1.msra.mxu0 %v1263
  %1463 = vmatprep.subr.mxu0 0.0
  %1464 = vmatpush1.msra.mxu0 %v1264
  %1465 = vmatprep.subr.mxu0 0.0
  %1466 = vmatpush1.msra.mxu0 %v1265
  %1467 = vmatprep.subr.mxu0 0.0
  %1468 = vmatpush1.msra.mxu0 %v1266
  %1469 = vmatprep.subr.mxu0 0.0
  %1470 = vmatpush1.msra.mxu0 %v1267
  %1471 = vmatprep.subr.mxu0 0.0
  %1472 = vmatpush1.msra.mxu0 %v1268
  %1473 = vmatprep.subr.mxu0 0.0
  %1474 = vmatpush1.msra.mxu0 %v1269
  %1475 = vmatprep.subr.mxu0 0.0
  %1476 = vmatpush1.msra.mxu0 %v1270
  %1477 = vmatprep.mubr.f32.mxu0 %v1406
  %1478 = vmatmul.mubr.f32.gmra.mrb[0].mxu0 %v1405
  %v1479 = vpop.f32.mrb[0].mxu0
  %v1480 = vadd.f32 0.0, %v1479
  %v1481 = vpop.f32.mrb[0].mxu0
  %1482 = vdwg.mxu0
  %1483 = vmatprep.subr.mxu0 0.0
  %1484 = vmatpush1.msra.mxu0 %v1271
  %1485 = vmatprep.subr.mxu0 0.0
  %1486 = vmatpush1.msra.mxu0 %v1272
  %1487 = vmatprep.subr.mxu0 0.0
  %1488 = vmatpush1.msra.mxu0 %v1273
  %1489 = vmatprep.subr.mxu0 0.0
  %1490 = vmatpush1.msra.mxu0 %v1274
  %1491 = vmatprep.subr.mxu0 0.0
  %1492 = vmatpush1.msra.mxu0 %v1275
  %1493 = vmatprep.subr.mxu0 0.0
  %1494 = vmatpush1.msra.mxu0 %v1276
  %1495 = vmatprep.subr.mxu0 0.0
  %1496 = vmatpush1.msra.mxu0 %v1277
  %1497 = vmatprep.subr.mxu0 0.0
  %1498 = vmatpush1.msra.mxu0 %v1278
  %1499 = vmatprep.subr.mxu0 0.0
  %1500 = vmatpush1.msra.mxu0 %v1279
  %1501 = vmatprep.subr.mxu0 0.0
  %1502 = vmatpush1.msra.mxu0 %v1280
  %1503 = vmatprep.subr.mxu0 0.0
  %1504 = vmatpush1.msra.mxu0 %v1281
  %1505 = vmatprep.subr.mxu0 0.0
  %1506 = vmatpush1.msra.mxu0 %v1282
  %1507 = vmatprep.subr.mxu0 0.0
  %1508 = vmatpush1.msra.mxu0 %v1283
  %1509 = vmatprep.subr.mxu0 0.0
  %1510 = vmatpush1.msra.mxu0 %v1284
  %1511 = vmatprep.subr.mxu0 0.0
  %1512 = vmatpush1.msra.mxu0 %v1285
  %1513 = vmatprep.subr.mxu0 0.0
  %1514 = vmatpush1.msra.mxu0 %v1286
  %1515 = vmatprep.subr.mxu0 0.0
  %1516 = vmatpush1.msra.mxu0 %v1287
  %1517 = vmatprep.subr.mxu0 0.0
  %1518 = vmatpush1.msra.mxu0 %v1288
  %1519 = vmatprep.subr.mxu0 0.0
  %1520 = vmatpush1.msra.mxu0 %v1289
  %1521 = vmatprep.subr.mxu0 0.0
  %1522 = vmatpush1.msra.mxu0 %v1290
  %1523 = vmatprep.subr.mxu0 0.0
  %1524 = vmatpush1.msra.mxu0 %v1291
  %1525 = vmatprep.subr.mxu0 0.0
  %1526 = vmatpush1.msra.mxu0 %v1292
  %1527 = vmatprep.subr.mxu0 0.0
  %1528 = vmatpush1.msra.mxu0 %v1293
  %1529 = vmatprep.subr.mxu0 0.0
  %1530 = vmatpush1.msra.mxu0 %v1294
  %1531 = vmatprep.subr.mxu0 0.0
  %1532 = vmatpush1.msra.mxu0 %v1295
  %1533 = vmatprep.subr.mxu0 0.0
  %1534 = vmatpush1.msra.mxu0 %v1296
  %1535 = vmatprep.subr.mxu0 0.0
  %1536 = vmatpush1.msra.mxu0 %v1297
  %1537 = vmatprep.subr.mxu0 0.0
  %1538 = vmatpush1.msra.mxu0 %v1298
  %1539 = vmatprep.subr.mxu0 0.0
  %1540 = vmatpush1.msra.mxu0 %v1299
  %1541 = vmatprep.subr.mxu0 0.0
  %1542 = vmatpush1.msra.mxu0 %v1300
  %1543 = vmatprep.subr.mxu0 0.0
  %1544 = vmatpush1.msra.mxu0 %v1301
  %1545 = vmatprep.subr.mxu0 0.0
  %1546 = vmatpush1.msra.mxu0 %v1302
  %1547 = vmatprep.mubr.f32.mxu0 %v1408
  %1548 = vmatmul.mubr.f32.gmra.mrb[0].mxu0 %v1407
  %v1549 = vpop.f32.mrb[0].mxu0
  %v1550 = vadd.f32 %v1480, %v1549
  %v1551 = vpop.f32.mrb[0].mxu0
  %1552 = vdwg.mxu0
  %1553 = vmatprep.subr.mxu0 0.0
  %1554 = vmatpush1.msra.mxu0 %v1303
  %1555 = vmatprep.subr.mxu0 0.0
  %1556 = vmatpush1.msra.mxu0 %v1304
  %1557 = vmatprep.subr.mxu0 0.0
  %1558 = vmatpush1.msra.mxu0 %v1305
  %1559 = vmatprep.subr.mxu0 0.0
  %1560 = vmatpush1.msra.mxu0 %v1306
  %1561 = vmatprep.subr.mxu0 0.0
  %1562 = vmatpush1.msra.mxu0 %v1307
  %1563 = vmatprep.subr.mxu0 0.0
  %1564 = vmatpush1.msra.mxu0 %v1308
  %1565 = vmatprep.subr.mxu0 0.0
  %1566 = vmatpush1.msra.mxu0 %v1309
  %1567 = vmatprep.subr.mxu0 0.0
  %1568 = vmatpush1.msra.mxu0 %v1310
  %1569 = vmatprep.subr.mxu0 0.0
  %1570 = vmatpush1.msra.mxu0 %v1311
  %1571 = vmatprep.subr.mxu0 0.0
  %1572 = vmatpush1.msra.mxu0 %v1312
  %1573 = vmatprep.subr.mxu0 0.0
  %1574 = vmatpush1.msra.mxu0 %v1313
  %1575 = vmatprep.subr.mxu0 0.0
  %1576 = vmatpush1.msra.mxu0 %v1314
  %1577 = vmatprep.subr.mxu0 0.0
  %1578 = vmatpush1.msra.mxu0 %v1315
  %1579 = vmatprep.subr.mxu0 0.0
  %1580 = vmatpush1.msra.mxu0 %v1316
  %1581 = vmatprep.subr.mxu0 0.0
  %1582 = vmatpush1.msra.mxu0 %v1317
  %1583 = vmatprep.subr.mxu0 0.0
  %1584 = vmatpush1.msra.mxu0 %v1318
  %1585 = vmatprep.subr.mxu0 0.0
  %1586 = vmatpush1.msra.mxu0 %v1319
  %1587 = vmatprep.subr.mxu0 0.0
  %1588 = vmatpush1.msra.mxu0 %v1320
  %1589 = vmatprep.subr.mxu0 0.0
  %1590 = vmatpush1.msra.mxu0 %v1321
  %1591 = vmatprep.subr.mxu0 0.0
  %1592 = vmatpush1.msra.mxu0 %v1322
  %1593 = vmatprep.subr.mxu0 0.0
  %1594 = vmatpush1.msra.mxu0 %v1323
  %1595 = vmatprep.subr.mxu0 0.0
  %1596 = vmatpush1.msra.mxu0 %v1324
  %1597 = vmatprep.subr.mxu0 0.0
  %1598 = vmatpush1.msra.mxu0 %v1325
  %1599 = vmatprep.subr.mxu0 0.0
  %1600 = vmatpush1.msra.mxu0 %v1326
  %1601 = vmatprep.subr.mxu0 0.0
  %1602 = vmatpush1.msra.mxu0 %v1327
  %1603 = vmatprep.subr.mxu0 0.0
  %1604 = vmatpush1.msra.mxu0 %v1328
  %1605 = vmatprep.subr.mxu0 0.0
  %1606 = vmatpush1.msra.mxu0 %v1329
  %1607 = vmatprep.subr.mxu0 0.0
  %1608 = vmatpush1.msra.mxu0 %v1330
  %1609 = vmatprep.subr.mxu0 0.0
  %1610 = vmatpush1.msra.mxu0 %v1331
  %1611 = vmatprep.subr.mxu0 0.0
  %1612 = vmatpush1.msra.mxu0 %v1332
  %1613 = vmatprep.subr.mxu0 0.0
  %1614 = vmatpush1.msra.mxu0 %v1333
  %1615 = vmatprep.subr.mxu0 0.0
  %1616 = vmatpush1.msra.mxu0 %v1334
  %1617 = vmatprep.mubr.f32.mxu0 %v1410
  %1618 = vmatmul.mubr.f32.gmra.mrb[0].mxu0 %v1409
  %v1619 = vpop.f32.mrb[0].mxu0
  %v1620 = vadd.f32 %v1550, %v1619
  %v1621 = vpop.f32.mrb[0].mxu0
  %1622 = vdwg.mxu0
  %1623 = vmatprep.subr.mxu0 0.0
  %1624 = vmatpush1.msra.mxu0 %v1335
  %1625 = vmatprep.subr.mxu0 0.0
  %1626 = vmatpush1.msra.mxu0 %v1336
  %1627 = vmatprep.subr.mxu0 0.0
  %1628 = vmatpush1.msra.mxu0 %v1337
  %1629 = vmatprep.subr.mxu0 0.0
  %1630 = vmatpush1.msra.mxu0 %v1338
  %1631 = vmatprep.subr.mxu0 0.0
  %1632 = vmatpush1.msra.mxu0 %v1339
  %1633 = vmatprep.subr.mxu0 0.0
  %1634 = vmatpush1.msra.mxu0 %v1340
  %1635 = vmatprep.subr.mxu0 0.0
  %1636 = vmatpush1.msra.mxu0 %v1341
  %1637 = vmatprep.subr.mxu0 0.0
  %1638 = vmatpush1.msra.mxu0 %v1342
  %1639 = vmatprep.subr.mxu0 0.0
  %1640 = vmatpush1.msra.mxu0 %v1343
  %1641 = vmatprep.subr.mxu0 0.0
  %1642 = vmatpush1.msra.mxu0 %v1344
  %1643 = vmatprep.subr.mxu0 0.0
  %1644 = vmatpush1.msra.mxu0 %v1345
  %1645 = vmatprep.subr.mxu0 0.0
  %1646 = vmatpush1.msra.mxu0 %v1346
  %1647 = vmatprep.subr.mxu0 0.0
  %1648 = vmatpush1.msra.mxu0 %v1347
  %1649 = vmatprep.subr.mxu0 0.0
  %1650 = vmatpush1.msra.mxu0 %v1348
  %1651 = vmatprep.subr.mxu0 0.0
  %1652 = vmatpush1.msra.mxu0 %v1349
  %1653 = vmatprep.subr.mxu0 0.0
  %1654 = vmatpush1.msra.mxu0 %v1350
  %1655 = vmatprep.subr.mxu0 0.0
  %1656 = vmatpush1.msra.mxu0 %v1351
  %1657 = vmatprep.subr.mxu0 0.0
  %1658 = vmatpush1.msra.mxu0 %v1352
  %1659 = vmatprep.subr.mxu0 0.0
  %1660 = vmatpush1.msra.mxu0 %v1353
  %1661 = vmatprep.subr.mxu0 0.0
  %1662 = vmatpush1.msra.mxu0 %v1354
  %1663 = vmatprep.subr.mxu0 0.0
  %1664 = vmatpush1.msra.mxu0 %v1355
  %1665 = vmatprep.subr.mxu0 0.0
  %1666 = vmatpush1.msra.mxu0 %v1356
  %1667 = vmatprep.subr.mxu0 0.0
  %1668 = vmatpush1.msra.mxu0 %v1357
  %1669 = vmatprep.subr.mxu0 0.0
  %1670 = vmatpush1.msra.mxu0 %v1358
  %1671 = vmatprep.subr.mxu0 0.0
  %1672 = vmatpush1.msra.mxu0 %v1359
  %1673 = vmatprep.subr.mxu0 0.0
  %1674 = vmatpush1.msra.mxu0 %v1360
  %1675 = vmatprep.subr.mxu0 0.0
  %1676 = vmatpush1.msra.mxu0 %v1361
  %1677 = vmatprep.subr.mxu0 0.0
  %1678 = vmatpush1.msra.mxu0 %v1362
  %1679 = vmatprep.subr.mxu0 0.0
  %1680 = vmatpush1.msra.mxu0 %v1363
  %1681 = vmatprep.subr.mxu0 0.0
  %1682 = vmatpush1.msra.mxu0 %v1364
  %1683 = vmatprep.subr.mxu0 0.0
  %1684 = vmatpush1.msra.mxu0 %v1365
  %1685 = vmatprep.subr.mxu0 0.0
  %1686 = vmatpush1.msra.mxu0 %v1366
  %1687 = vmatprep.mubr.f32.mxu0 %v1412
  %1688 = vmatmul.mubr.f32.gmra.mrb[0].mxu0 %v1411
  %v1689 = vpop.f32.mrb[0].mxu0
  %v1690 = vadd.f32 %v1620, %v1689
  %v1691 = vpop.f32.mrb[0].mxu0
  %1692 = vdwg.mxu0
  %v1693 = vld [vmem:[%s3] sm:$0xff]
  %v1694 = vld [vmem:[%s3 + $0x8] sm:$0xff]
  %v1695 = vld [vmem:[%s3 + $0x10] sm:$0xff]
  %v1696 = vld [vmem:[%s3 + $0x18] sm:$0xff]
  %v1697 = vld [vmem:[%s3 + $0x20] sm:$0xff]
  %v1698 = vld [vmem:[%s3 + $0x28] sm:$0xff]
  %v1699 = vld [vmem:[%s3 + $0x30] sm:$0xff]
  %v1700 = vld [vmem:[%s3 + $0x38] sm:$0xff]
  %v1701 = vld [vmem:[%s3 + $0x40] sm:$0xff]
  %v1702 = vld [vmem:[%s3 + $0x48] sm:$0xff]
  %v1703 = vld [vmem:[%s3 + $0x50] sm:$0xff]
  %v1704 = vld [vmem:[%s3 + $0x58] sm:$0xff]
  %v1705 = vld [vmem:[%s3 + $0x60] sm:$0xff]
  %v1706 = vld [vmem:[%s3 + $0x68] sm:$0xff]
  %v1707 = vld [vmem:[%s3 + $0x70] sm:$0xff]
  %v1708 = vld [vmem:[%s3 + $0x78] sm:$0xff]
  %v1709 = vld [vmem:[%s4] sm:$0xff]
  %v1710 = vld [vmem:[%s4 + $0x8] sm:$0xff]
  %v1711 = vld [vmem:[%s4 + $0x10] sm:$0xff]
  %v1712 = vld [vmem:[%s4 + $0x18] sm:$0xff]
  %v1713 = vld [vmem:[%s4 + $0x20] sm:$0xff]
  %v1714 = vld [vmem:[%s4 + $0x28] sm:$0xff]
  %v1715 = vld [vmem:[%s4 + $0x30] sm:$0xff]
  %v1716 = vld [vmem:[%s4 + $0x38] sm:$0xff]
  %v1717 = vld [vmem:[%s4 + $0x40] sm:$0xff]
  %v1718 = vld [vmem:[%s4 + $0x48] sm:$0xff]
  %v1719 = vld [vmem:[%s4 + $0x50] sm:$0xff]
  %v1720 = vld [vmem:[%s4 + $0x58] sm:$0xff]
  %v1721 = vld [vmem:[%s4 + $0x60] sm:$0xff]
  %v1722 = vld [vmem:[%s4 + $0x68] sm:$0xff]
  %v1723 = vld [vmem:[%s4 + $0x70] sm:$0xff]
  %v1724 = vld [vmem:[%s4 + $0x78] sm:$0xff]
  %v1726 = vrot.slane %v1690, 2
  %1728 = vmatprep.subr.mxu0 0.0
  %1729 = vmatpush1.msra.mxu0 %v1709
  %1730 = vmatprep.subr.mxu0 0.0
  %1731 = vmatpush1.msra.mxu0 %v1710
  %1732 = vmatprep.subr.mxu0 0.0
  %1733 = vmatpush1.msra.mxu0 %v1711
  %1734 = vmatprep.subr.mxu0 0.0
  %1735 = vmatpush1.msra.mxu0 %v1712
  %1736 = vmatprep.subr.mxu0 0.0
  %1737 = vmatpush1.msra.mxu0 %v1713
  %1738 = vmatprep.subr.mxu0 0.0
  %1739 = vmatpush1.msra.mxu0 %v1714
  %1740 = vmatprep.subr.mxu0 0.0
  %1741 = vmatpush1.msra.mxu0 %v1715
  %1742 = vmatprep.subr.mxu0 0.0
  %1743 = vmatpush1.msra.mxu0 %v1716
  %1744 = vmatprep.subr.mxu0 0.0
  %1745 = vmatpush1.msra.mxu0 %v1717
  %1746 = vmatprep.subr.mxu0 0.0
  %1747 = vmatpush1.msra.mxu0 %v1718
  %1748 = vmatprep.subr.mxu0 0.0
  %1749 = vmatpush1.msra.mxu0 %v1719
  %1750 = vmatprep.subr.mxu0 0.0
  %1751 = vmatpush1.msra.mxu0 %v1720
  %1752 = vmatprep.subr.mxu0 0.0
  %1753 = vmatpush1.msra.mxu0 %v1721
  %1754 = vmatprep.subr.mxu0 0.0
  %1755 = vmatpush1.msra.mxu0 %v1722
  %1756 = vmatprep.subr.mxu0 0.0
  %1757 = vmatpush1.msra.mxu0 %v1723
  %1758 = vmatprep.subr.mxu0 0.0
  %1759 = vmatpush1.msra.mxu0 %v1724
  %1760 = vmatprep.subr.mxu0 0.0
  %1761 = vmatpush1.msra.mxu0 0.0
  %1762 = vmatprep.subr.mxu0 0.0
  %1763 = vmatpush1.msra.mxu0 0.0
  %1764 = vmatprep.subr.mxu0 0.0
  %1765 = vmatpush1.msra.mxu0 0.0
  %1766 = vmatprep.subr.mxu0 0.0
  %1767 = vmatpush1.msra.mxu0 0.0
  %1768 = vmatprep.subr.mxu0 0.0
  %1769 = vmatpush1.msra.mxu0 0.0
  %1770 = vmatprep.subr.mxu0 0.0
  %1771 = vmatpush1.msra.mxu0 0.0
  %1772 = vmatprep.subr.mxu0 0.0
  %1773 = vmatpush1.msra.mxu0 0.0
  %1774 = vmatprep.subr.mxu0 0.0
  %1775 = vmatpush1.msra.mxu0 0.0
  %1776 = vmatprep.subr.mxu0 0.0
  %1777 = vmatpush1.msra.mxu0 0.0
  %1778 = vmatprep.subr.mxu0 0.0
  %1779 = vmatpush1.msra.mxu0 0.0
  %1780 = vmatprep.subr.mxu0 0.0
  %1781 = vmatpush1.msra.mxu0 0.0
  %1782 = vmatprep.subr.mxu0 0.0
  %1783 = vmatpush1.msra.mxu0 0.0
  %1784 = vmatprep.subr.mxu0 0.0
  %1785 = vmatpush1.msra.mxu0 0.0
  %1786 = vmatprep.subr.mxu0 0.0
  %1787 = vmatpush1.msra.mxu0 0.0
  %1788 = vmatprep.subr.mxu0 0.0
  %1789 = vmatpush1.msra.mxu0 0.0
  %1790 = vmatprep.subr.mxu0 0.0
  %1791 = vmatpush1.msra.mxu0 0.0
  %1792 = vmatprep.mubr.f32.mxu0 0.0
  %1793 = vmatmul.mubr.f32.gmra.mrb[0].mxu0 %v1726
  %v1794 = vpop.f32.mrb[0].mxu0
  %v1795 = vadd.f32 0.0, %v1794
  %v1796 = vpop.f32.mrb[0].mxu0
  %1797 = vdwg.mxu0
  %1798 = vmatprep.subr.mxu0 0.0
  %1799 = vmatpush1.msra.mxu0 %v1693
  %1800 = vmatprep.subr.mxu0 0.0
  %1801 = vmatpush1.msra.mxu0 %v1694
  %1802 = vmatprep.subr.mxu0 0.0
  %1803 = vmatpush1.msra.mxu0 %v1695
  %1804 = vmatprep.subr.mxu0 0.0
  %1805 = vmatpush1.msra.mxu0 %v1696
  %1806 = vmatprep.subr.mxu0 0.0
  %1807 = vmatpush1.msra.mxu0 %v1697
  %1808 = vmatprep.subr.mxu0 0.0
  %1809 = vmatpush1.msra.mxu0 %v1698
  %1810 = vmatprep.subr.mxu0 0.0
  %1811 = vmatpush1.msra.mxu0 %v1699
  %1812 = vmatprep.subr.mxu0 0.0
  %1813 = vmatpush1.msra.mxu0 %v1700
  %1814 = vmatprep.subr.mxu0 0.0
  %1815 = vmatpush1.msra.mxu0 %v1701
  %1816 = vmatprep.subr.mxu0 0.0
  %1817 = vmatpush1.msra.mxu0 %v1702
  %1818 = vmatprep.subr.mxu0 0.0
  %1819 = vmatpush1.msra.mxu0 %v1703
  %1820 = vmatprep.subr.mxu0 0.0
  %1821 = vmatpush1.msra.mxu0 %v1704
  %1822 = vmatprep.subr.mxu0 0.0
  %1823 = vmatpush1.msra.mxu0 %v1705
  %1824 = vmatprep.subr.mxu0 0.0
  %1825 = vmatpush1.msra.mxu0 %v1706
  %1826 = vmatprep.subr.mxu0 0.0
  %1827 = vmatpush1.msra.mxu0 %v1707
  %1828 = vmatprep.subr.mxu0 0.0
  %1829 = vmatpush1.msra.mxu0 %v1708
  %1830 = vmatprep.subr.mxu0 0.0
  %1831 = vmatpush1.msra.mxu0 0.0
  %1832 = vmatprep.subr.mxu0 0.0
  %1833 = vmatpush1.msra.mxu0 0.0
  %1834 = vmatprep.subr.mxu0 0.0
  %1835 = vmatpush1.msra.mxu0 0.0
  %1836 = vmatprep.subr.mxu0 0.0
  %1837 = vmatpush1.msra.mxu0 0.0
  %1838 = vmatprep.subr.mxu0 0.0
  %1839 = vmatpush1.msra.mxu0 0.0
  %1840 = vmatprep.subr.mxu0 0.0
  %1841 = vmatpush1.msra.mxu0 0.0
  %1842 = vmatprep.subr.mxu0 0.0
  %1843 = vmatpush1.msra.mxu0 0.0
  %1844 = vmatprep.subr.mxu0 0.0
  %1845 = vmatpush1.msra.mxu0 0.0
  %1846 = vmatprep.subr.mxu0 0.0
  %1847 = vmatpush1.msra.mxu0 0.0
  %1848 = vmatprep.subr.mxu0 0.0
  %1849 = vmatpush1.msra.mxu0 0.0
  %1850 = vmatprep.subr.mxu0 0.0
  %1851 = vmatpush1.msra.mxu0 0.0
  %1852 = vmatprep.subr.mxu0 0.0
  %1853 = vmatpush1.msra.mxu0 0.0
  %1854 = vmatprep.subr.mxu0 0.0
  %1855 = vmatpush1.msra.mxu0 0.0
  %1856 = vmatprep.subr.mxu0 0.0
  %1857 = vmatpush1.msra.mxu0 0.0
  %1858 = vmatprep.subr.mxu0 0.0
  %1859 = vmatpush1.msra.mxu0 0.0
  %1860 = vmatprep.subr.mxu0 0.0
  %1861 = vmatpush1.msra.mxu0 0.0
  %1862 = vmatprep.mubr.f32.mxu0 0.0
  %1863 = vmatmul.mubr.f32.gmra.mrb[0].mxu0 %v1690
  %v1864 = vpop.f32.mrb[0].mxu0
  %v1865 = vadd.f32 %v1795, %v1864
  %v1866 = vpop.f32.mrb[0].mxu0
  %1867 = vdwg.mxu0
  %v1868 = vld [vmem:[%s5] sm:$0x1]
  %v1870 = vlaneseq
  %v1871 = vshrl.u32 %v1870, 7
  %v1872 = vsub.s32 0, %v1871
  %v1873 = vrot.slane %v1868, %v1872
  %v1875 = vadd.f32 %v1865, %v1873
  %1876 = vst [vmem:[%s6] sm:$0x3] %v1875
  // Predicated region
  $region26: #{va_ranking_forward.1} parent=0 // pred_check
    _
  $region27: #{va_ranking_forward.1} parent=0 // pred_check_branch
    %1878 = sbr.rel (0) target = $region29
  $region28: #{va_ranking_forward.1} parent=0 // pred_region
    _
  $region29: #{va_ranking_forward.1} parent=0 // pred_fallthru
    _
  // Predicated region
  $region30: #{va_ranking_forward.1} parent=0 // pred_check
    _
  $region31: #{va_ranking_forward.1} parent=0 // pred_check_branch
    %1880 = sbr.rel (0) target = $region33
  $region32: #{va_ranking_forward.1} parent=0 // pred_region
    _
  $region33: #{va_ranking_forward.1} parent=0 // pred_fallthru
    _

</llo_original>
